<compile_context>
chip_gen: v6e
topology: v6e:2x2x1
jax: 0.10.0
libtpu: 0.0.40
codegen_flags: <defaults>
</compile_context>

<pallas_src>
import math

import jax
import jax.numpy as jnp
from jax.experimental import pallas as pl
from jax.experimental.pallas import tpu as pltpu


_K = 8  # padded contraction dim for the MXU phase matmul (sublane-aligned)


def _round_up(a: int, m: int) -> int:
    return ((a + m - 1) // m) * m


def _gfp_kernel(x_ref, w_ref, o_ref):
    # x_ref: (TB, K) f32    col 0 = x, col 1 = 1 (bias lane), cols 2.. = 0
    # w_ref: (K, 2*E_pad)   row 0 = [2piW | 2piW], row 1 = [0 | pi/2], rows 2.. = 0
    # o_ref: (TB, 2*E_pad)  out_dtype
    phase = jnp.dot(
        x_ref[...], w_ref[...],
        preferred_element_type=jnp.float32,
        precision=jax.lax.Precision.HIGHEST,  # keep the phase f32-accurate on the MXU
    )
    # cos(t) == sin(t + pi/2): single transcendental pass, single lane-dense store.
    o_ref[...] = jnp.sin(phase).astype(o_ref.dtype)


class GaussianFourierProjection:
    """out = concat([sin(2*pi*x[:,None]*W), cos(2*pi*x[:,None]*W)], -1)."""

    def __init__(self, W, *, tb=1024, out_dtype=jnp.float32):
        W = jnp.asarray(W, jnp.float32)
        self.E = int(W.shape[0])
        self.E_pad = _round_up(self.E, 128)            # lane alignment
        self.tb = max(8, int(tb) // 8 * 8)
        self.out_dtype = out_dtype

        # Frozen operand, built once at init: row 0 = [2piW | 2piW]; row 1 =
        # cos-half phase bias pi/2 on real lanes only (padded lanes -> sin(0)=0).
        w = jnp.zeros((self.E_pad,), jnp.float32).at[: self.E].set(W * (2.0 * math.pi))
        b = jnp.zeros((self.E_pad,), jnp.float32).at[: self.E].set(0.5 * math.pi)
        w_row = jnp.concatenate([w, w])
        b_row = jnp.concatenate([jnp.zeros((self.E_pad,), jnp.float32), b])
        self.w_aug = (
            jnp.zeros((_K, 2 * self.E_pad), jnp.float32)
            .at[0].set(w_row)
            .at[1].set(b_row)
        )

    def _tiling(self, B: int):
        itemsize = jnp.dtype(self.out_dtype).itemsize
        # Double-buffered output tile + x tile must fit a conservative VMEM
        # budget (v7x: 64 MiB physical / 32 MiB scoped default -> leave headroom).
        vmem_budget = 24 * 1024 * 1024
        per_row = 2 * (2 * self.E_pad * itemsize + _K * 4)
        tb_max = max(8, min(self.tb, vmem_budget // per_row) // 8 * 8)
        g = -(-B // tb_max)        # minimum number of tiles at the VMEM-safe cap
        if B >= 16:
            g = max(g, 2)          # >= 2 grid steps so both v7x TensorCores engage
            g += g % 2             # even grid -> balanced 2-TC split
        TB = _round_up(-(-B // g), 8)   # minimal batch padding; TB <= tb_max holds
        return g, TB, g * TB

    def __call__(self, x):
        B = int(x.shape[0])
        E, E_pad = self.E, self.E_pad
        g, TB, B_pad = self._tiling(B)
        itemsize = jnp.dtype(self.out_dtype).itemsize

        # (B_pad, K): col 0 = x, col 1 = 1 (bias lane), rest 0. Padded rows are
        # all-zero -> phase 0 -> output 0 for every padded element.
        x_aug = jnp.stack([x.astype(jnp.float32), jnp.ones((B,), jnp.float32)], axis=1)
        x_aug = jnp.pad(x_aug, ((0, B_pad - B), (0, _K - 2)))

        out = pl.pallas_call(
            _gfp_kernel,
            out_shape=jax.ShapeDtypeStruct((B_pad, 2 * E_pad), self.out_dtype),
            grid=(g,),
            in_specs=[
                pl.BlockSpec((TB, _K), lambda i: (i, 0)),
                pl.BlockSpec((_K, 2 * E_pad), lambda i: (0, 0)),
            ],
            out_specs=pl.BlockSpec((TB, 2 * E_pad), lambda i: (i, 0)),
            compiler_params=pltpu.CompilerParams(
                dimension_semantics=("parallel",),
            ),
            cost_estimate=pl.CostEstimate(
                flops=2 * _K * B_pad * 2 * E_pad,
                transcendentals=B_pad * 2 * E_pad,
                bytes_accessed=(B_pad * _K * 4
                                + _K * 2 * E_pad * 4
                                + B_pad * 2 * E_pad * itemsize),
            ),
        )(x_aug, self.w_aug)

        if E_pad == E:
            return out if B_pad == B else out[:B]       # cheap row slice only
        # TODO(synk): for embed_dim % 128 != 0 the strip below re-streams the
        # result through HBM; consumers should fuse it into their first matmul
        # or accept the padded (B_pad, 2*E_pad) layout directly.
        return jnp.concatenate([out[:B, :E], out[:B, E_pad:E_pad + E]], axis=-1)


def reference(x, W):
    proj = x[:, None] * W[None, :] * 2.0 * math.pi
    return jnp.concatenate([jnp.sin(proj), jnp.cos(proj)], axis=-1)


if __name__ == "__main__":
    key = jax.random.PRNGKey(0)
    k_w, k_x = jax.random.split(key)

    # Small TPU-friendly demo sizes (sublane=8, lane=128). The real module uses
    # embed_dim=768 (also a multiple of 128) and works identically.
    batch = 24
    embed_dim = 256
    scale = 10.0

    # Deterministic synthetic frozen parameter: W = randn(embed_dim) * scale
    W = jax.random.normal(k_w, (embed_dim,), dtype=jnp.float32) * scale
    # Example input: diffusion timesteps in [0, 1)
    x = jax.random.uniform(k_x, (batch,), dtype=jnp.float32)

    gfp = GaussianFourierProjection(W)          # frozen operand built once
    out = jax.block_until_ready(gfp(x))

    ref = reference(x, W)
    assert out.shape == (batch, 2 * embed_dim), out.shape
    max_err = float(jnp.max(jnp.abs(out - ref)))
    # cos(t) = sin(t + pi/2) and the HIGHEST-precision MXU phase agree with the
    # f32 reference to a few ulps of the (large) phase argument.
    assert max_err < 5e-4, max_err
    print("KERNEL_OK")
</pallas_src>

<mosaic_0001>
module attributes {stable_mosaic.version = 11 : i64} {
  func.func @_gfp_kernel(%arg0: i32, %arg1: memref<16x8xf32, #tpu.memory_space<vmem>>, %arg2: memref<8x512xf32, #tpu.memory_space<vmem>>, %arg3: memref<16x512xf32, #tpu.memory_space<vmem>>) attributes {dimension_semantics = [#tpu.dimension_semantics<parallel>], iteration_bounds = array<i64: 2>, scalar_prefetch = 0 : i64, scratch_operands = 0 : i64, tpu.core_type = #tpu.core_type<tc>, window_params = [{transform_indices = @transform_0, window_bounds = array<i64: 16, 8>}, {pipeline_mode = #tpu.pipeline_mode<synchronous>, transform_indices = @transform_1, window_bounds = array<i64: 8, 512>}, {transform_indices = @transform_2, window_bounds = array<i64: 16, 512>}]} {
    %c0 = arith.constant 0 : index
    %c0_0 = arith.constant 0 : index
    %0 = vector.load %arg1[%c0, %c0_0] : memref<16x8xf32, #tpu.memory_space<vmem>>, vector<16x8xf32>
    %c0_1 = arith.constant 0 : index
    %c0_2 = arith.constant 0 : index
    %1 = vector.load %arg2[%c0_1, %c0_2] : memref<8x512xf32, #tpu.memory_space<vmem>>, vector<8x512xf32>
    %cst = arith.constant dense<0.000000e+00> : vector<16x512xf32>
    %2 = tpu.matmul %0, %1, %cst {dimension_numbers = #tpu.dot_dimension_numbers<[1], [0], [0], [1], [0, 0, 1, 1], [], []>, precision = #tpu.contract_precision<fp32>} : vector<16x8xf32>, vector<8x512xf32>, vector<16x512xf32> -> vector<16x512xf32>
    %3 = math.sin %2 : vector<16x512xf32>
    %c0_3 = arith.constant 0 : index
    %c0_4 = arith.constant 0 : index
    %4 = vector.load %arg3[%c0_3, %c0_4] : memref<16x512xf32, #tpu.memory_space<vmem>>, vector<16x512xf32>
    tpu.vector_store %arg3[%c0_3, %c0_4], %3 {strides = array<i32>} : memref<16x512xf32, #tpu.memory_space<vmem>>, vector<16x512xf32>,
    return
  }
  func.func @transform_0(%arg0: i32) -> (i32, i32) {
    %c0_i32 = arith.constant 0 : i32
    %c0_i32_0 = arith.constant 0 : i32
    return %arg0, %c0_i32 : i32, i32
  }
  func.func @transform_1(%arg0: i32) -> (i32, i32) {
    %c0_i32 = arith.constant 0 : i32
    %c0_i32_0 = arith.constant 0 : i32
    %c0_i32_1 = arith.constant 0 : i32
    return %c0_i32, %c0_i32_0 : i32, i32
  }
  func.func @transform_2(%arg0: i32) -> (i32, i32) {
    %c0_i32 = arith.constant 0 : i32
    %c0_i32_0 = arith.constant 0 : i32
    return %arg0, %c0_i32 : i32, i32
  }
}

</mosaic_0001>

<llo_original>
// kernel: tpu_custom_call.1
$region0: #{tpu_custom_call.1}
  #allocation0 [shape = 'u32[]', space=smem, size = 0x4, offset = 0x4, fixed_abs, tag = 'smem constant byte address 0x4 - core index']
  #allocation1 [shape = 'u32[144,128]{1,0:T(1,128)}', space=vmem, size = 0x12000, scoped, tag = 'internal scratch']
  %s0 = inlined_call_operand.vmem [shape: f32[32,8], index: 0, kind: input, shape index: {}]
  %s1 = inlined_call_operand.vmem [shape: f32[8,512], index: 1, kind: input, shape index: {}]
  %s2 = inlined_call_operand.hbm [shape: f32[32,512], index: 2, kind: output, shape index: {}]
  %s3 = sld [smem:[#allocation0]]
  $region41: #{tpu_custom_call.1} parent=0
    _
  %s5 = ssub.s32 1, %s3
  %s6 = scalar_select 0, %s5, %s3
  $region1: #{tpu_custom_call.1} parent=0
    #allocation2 [shape = 'u8[65536]{0}', space=vmem, size = 0x10000, scoped, tag = 'output window, operand 0']
    #allocation3 [shape = 's32[2]{0}', space=sflag, size = 0x8, scoped, tag = 'scoped memory for tpu_custom_call.1']
    %7 = vsyncpa [#allocation3], 0
    %s8 = scalar_lea.sflag [#allocation3], 1
    %9 = vsyncpa %s8, 0
    loop: start=0, step=1, limit=4
    $region2: #{tpu_custom_call.1} parent=1 // loop_pre_header
      _
    $region3: #{tpu_custom_call.1} parent=1 // loop_header
      %s11 = sphi 0, %s15
      %p12 = scmp.ge.s32.totalorder %s11, 4
      %s21 = sphi 0, %s23
      %s24 = sphi 0, %s21
      %s25 = sphi 0, %s24
      %s41 = sphi 0, %s25
      %s45 = sphi 0, %s45
      %s47 = sphi 0, %s45
      %s48 = sphi 0, %s47
      %s62 = sphi 0, %s48
      %s68 = sphi 0, %s70
      %s71 = sphi 0, %s68
      %s72 = sphi 0, %s71
      %s88 = sphi 0, %s72
    $region4: #{tpu_custom_call.1} parent=1 // loop_header_branch
      %14 = sbr.rel (%p12) target = $region8
    $region5: #{tpu_custom_call.1} parent=1 // loop_body
      %s16 = ssub.s32 %s11, 1
      %s17 = ssub.s32 %s11, 2
      %s18 = sadd.s32 %s11, 1
      %s19 = ssub.s32 %s11, %s18
      %p20 = scmp.eq.s32.totalorder %s19, 0
      %s22 = sadd.s32 %s21, 1
      %s23 = scalar_select %p20, %s21, %s22
      %p26 = pneg %p20
      %p27 = scmp.eq.s32.totalorder %s11, 1
      %p28 = por %p26, %p27
      %p29 = scmp.ne.s32.totalorder %s21, %s24
      %p30 = scmp.eq.s32.totalorder %s11, 0
      %p31 = por %p29, %p30
      %p32 = scmp.ne.s32.totalorder %s21, %s24
      %p33 = scmp.eq.s32.totalorder %s16, 1
      %p34 = por %p32, %p33
      %p35 = scmp.ne.s32.totalorder %s24, %s25
      %p36 = scmp.eq.s32.totalorder %s16, 0
      %p37 = por %p35, %p36
      %p38 = scmp.ne.s32.totalorder %s24, %s25
      %p39 = scmp.eq.s32.totalorder %s17, 1
      %p40 = por %p38, %p39
      %p42 = scmp.ne.s32.totalorder %s25, %s41
      %p43 = scmp.eq.s32.totalorder %s17, 0
      %p44 = por %p42, %p43
      %s46 = sadd.s32 %s45, 1
      %p49 = scmp.eq.s32.totalorder %s11, 1
      %p50 = scmp.ne.s32.totalorder %s45, %s47
      %p51 = scmp.eq.s32.totalorder %s11, 0
      %p52 = por %p50, %p51
      %p53 = scmp.ne.s32.totalorder %s45, %s47
      %p54 = scmp.eq.s32.totalorder %s16, 1
      %p55 = por %p53, %p54
      %p56 = scmp.ne.s32.totalorder %s47, %s48
      %p57 = scmp.eq.s32.totalorder %s16, 0
      %p58 = por %p56, %p57
      %p59 = scmp.ne.s32.totalorder %s47, %s48
      %p60 = scmp.eq.s32.totalorder %s17, 1
      %p61 = por %p59, %p60
      %p63 = scmp.ne.s32.totalorder %s48, %s62
      %p64 = scmp.eq.s32.totalorder %s17, 0
      %p65 = por %p63, %p64
      %s66 = ssub.s32 %s11, %s18
      %p67 = scmp.eq.s32.totalorder %s66, 0
      %s69 = sadd.s32 %s68, 1
      %s70 = scalar_select %p67, %s68, %s69
      %p73 = pneg %p67
      %p74 = scmp.eq.s32.totalorder %s11, 1
      %p75 = por %p73, %p74
      %p76 = scmp.ne.s32.totalorder %s68, %s71
      %p77 = scmp.eq.s32.totalorder %s11, 0
      %p78 = por %p76, %p77
      %p79 = scmp.ne.s32.totalorder %s68, %s71
      %p80 = scmp.eq.s32.totalorder %s16, 1
      %p81 = por %p79, %p80
      %p82 = scmp.ne.s32.totalorder %s71, %s72
      %p83 = scmp.eq.s32.totalorder %s16, 0
      %p84 = por %p82, %p83
      %p85 = scmp.ne.s32.totalorder %s71, %s72
      %p86 = scmp.eq.s32.totalorder %s17, 1
      %p87 = por %p85, %p86
      %p89 = scmp.ne.s32.totalorder %s72, %s88
      %p90 = scmp.eq.s32.totalorder %s17, 0
      %p91 = por %p89, %p90
      %p92 = scmp.le.s32.totalorder 1, %s11
      %p93 = scmp.lt.s32.totalorder %s11, 3
      %p94 = pnand %p92, %p93
      %p95 = pneg %p94
      // Predicated region
      $region9: #{tpu_custom_call.1} parent=5 // pred_check
        _
      $region10: #{tpu_custom_call.1} parent=5 // pred_check_branch
        %97 = sbr.rel (%p94) target = $region12
      $region11: #{tpu_custom_call.1} parent=5 // pred_region
        %s98 = ssub.s32 %s11, 1
        // Predicated region
        $region13: #{tpu_custom_call.1} parent=11 // pred_check
          %p99 = pneg %p58
        $region14: #{tpu_custom_call.1} parent=11 // pred_check_branch
          %101 = sbr.rel (%p99) target = $region16
        $region15: #{tpu_custom_call.1} parent=11 // pred_region
          _
        $region16: #{tpu_custom_call.1} parent=11 // pred_fallthru
          _
      $region12: #{tpu_custom_call.1} parent=5 // pred_fallthru
        _
      %p102 = scmp.lt.s32.totalorder %s11, 2
      // Predicated region
      $region17: #{tpu_custom_call.1} parent=5 // pred_check
        %p103 = pneg %p102
      $region18: #{tpu_custom_call.1} parent=5 // pred_check_branch
        %105 = sbr.rel (%p103) target = $region20
      $region19: #{tpu_custom_call.1} parent=5 // pred_region
        // Predicated region
        $region21: #{tpu_custom_call.1} parent=19 // pred_check
          %p106 = pneg %p31
        $region22: #{tpu_custom_call.1} parent=19 // pred_check_branch
          %108 = sbr.rel (%p106) target = $region24
        $region23: #{tpu_custom_call.1} parent=19 // pred_region
          %s109 = smul.u32 2, %s11
          %p110 = scmp.lt.s32.totalorder %s109, 3
          %s111 = scalar_select %p110, %s109, 3
          %s112 = smul.addr %s111, 8
          %s113 = scalar_lea.vmem %s0, %s112
          %s114 = smul.u32 2, %s11
        $region24: #{tpu_custom_call.1} parent=19 // pred_fallthru
          _
      $region20: #{tpu_custom_call.1} parent=5 // pred_fallthru
        _
      %p115 = scmp.le.s32.totalorder 1, %s11
      %p116 = scmp.lt.s32.totalorder %s11, 3
      %p117 = pnand %p115, %p116
      %p118 = pneg %p117
      // Predicated region
      $region25: #{tpu_custom_call.1} parent=5 // pred_check
        _
      $region26: #{tpu_custom_call.1} parent=5 // pred_check_branch
        %120 = sbr.rel (%p117) target = $region28
      $region27: #{tpu_custom_call.1} parent=5 // pred_region
        %s121 = ssub.s32 %s11, 1
        %s122 = smul.u32 2, %s16
        %p123 = scmp.lt.s32.totalorder %s122, 3
        %s124 = scalar_select %p123, %s122, 3
        %s125 = smul.addr %s124, 8
        %s126 = scalar_lea.vmem %s0, %s125
        %p127 = pneg %p37
        %p128 = pneg %p34
        %p129 = pneg %p58
        %p130 = pneg %p55
        %p131 = pneg %p84
        %p132 = pneg %p81
        %s133 = sand.u32 %s71, 1
        %s134 = scalar_lea.sflag [#allocation3], %s133
        %s135 = sand.u32 %s71, 1
        %s136 = smul.addr %s135, 64
        %s137 = scalar_lea.vmem [#allocation2], %s136
        %s138 = smul.u32 2, %s16
        %p139 = scmp.lt.s32.totalorder %s138, 3
        %s140 = scalar_select %p139, %s138, 3
        %s141 = smul.addr %s140, 8
        %s142 = scalar_lea.vmem %s0, %s141
        %s143 = smul.u32 2, %s16
        %s144 = smul.u32 2, %s16
        %v145 = vld [vmem:[%s142] sm:$0xff]
        %v146 = vld [vmem:[%s142 + $0x8] sm:$0xff]
        %v147 = vld [vmem:[%s1] sm:$0xff]
        %v148 = vld [vmem:[%s1 + $0x8] sm:$0xff]
        %v149 = vld [vmem:[%s1 + $0x10] sm:$0xff]
        %v150 = vld [vmem:[%s1 + $0x18] sm:$0xff]
        %vm151 = vcmask 64512
        %v153 = vsel %vm151, %v145, 0
        %v156 = vsel %vm151, %v146, 0
        %158 = vmatprep.subr.mxu0 0.0
        %159 = vmatpush1.msra.mxu0 0.0
        %160 = vmatprep.subr.mxu0 0.0
        %161 = vmatpush1.msra.mxu0 0.0
        %162 = vmatprep.subr.mxu0 0.0
        %163 = vmatpush1.msra.mxu0 0.0
        %164 = vmatprep.subr.mxu0 0.0
        %165 = vmatpush1.msra.mxu0 0.0
        %166 = vmatprep.subr.mxu0 0.0
        %167 = vmatpush1.msra.mxu0 0.0
        %168 = vmatprep.subr.mxu0 0.0
        %169 = vmatpush1.msra.mxu0 0.0
        %170 = vmatprep.subr.mxu0 0.0
        %171 = vmatpush1.msra.mxu0 0.0
        %172 = vmatprep.subr.mxu0 0.0
        %173 = vmatpush1.msra.mxu0 0.0
        %174 = vmatprep.subr.mxu0 0.0
        %175 = vmatpush1.msra.mxu0 0.0
        %176 = vmatprep.subr.mxu0 0.0
        %177 = vmatpush1.msra.mxu0 0.0
        %178 = vmatprep.subr.mxu0 0.0
        %179 = vmatpush1.msra.mxu0 0.0
        %180 = vmatprep.subr.mxu0 0.0
        %181 = vmatpush1.msra.mxu0 0.0
        %182 = vmatprep.subr.mxu0 0.0
        %183 = vmatpush1.msra.mxu0 0.0
        %184 = vmatprep.subr.mxu0 0.0
        %185 = vmatpush1.msra.mxu0 0.0
        %186 = vmatprep.subr.mxu0 0.0
        %187 = vmatpush1.msra.mxu0 0.0
        %v188 = vand.u32 %v148, 4294901760
        %189 = vmatprep.subr.mxu0 %v188
        %v190 = vand.u32 %v147, 4294901760
        %191 = vmatpush1.msra.mxu0 %v190
        %192 = vmatprep.subr.mxu0 0.0
        %193 = vmatpush2.msra.mxu0 0.0
        %194 = vmatprep.subr.mxu0 0.0
        %195 = vmatpush2.msra.mxu0 0.0
        %196 = vmatprep.subr.mxu0 0.0
        %197 = vmatpush2.msra.mxu0 0.0
        %198 = vmatprep.subr.mxu0 0.0
        %199 = vmatpush2.msra.mxu0 0.0
        %200 = vmatprep.subr.mxu0 0.0
        %201 = vmatpush2.msra.mxu0 0.0
        %202 = vmatprep.subr.mxu0 0.0
        %203 = vmatpush2.msra.mxu0 0.0
        %204 = vmatprep.subr.mxu0 0.0
        %205 = vmatpush2.msra.mxu0 0.0
        %206 = vmatprep.subr.mxu0 0.0
        %207 = vmatpush2.msra.mxu0 0.0
        %208 = vmatprep.subr.mxu0 0.0
        %209 = vmatpush2.msra.mxu0 0.0
        %210 = vmatprep.subr.mxu0 0.0
        %211 = vmatpush2.msra.mxu0 0.0
        %212 = vmatprep.subr.mxu0 0.0
        %213 = vmatpush2.msra.mxu0 0.0
        %214 = vmatprep.subr.mxu0 0.0
        %215 = vmatpush2.msra.mxu0 0.0
        %216 = vmatprep.subr.mxu0 0.0
        %217 = vmatpush2.msra.mxu0 0.0
        %218 = vmatprep.subr.mxu0 0.0
        %219 = vmatpush2.msra.mxu0 0.0
        %220 = vmatprep.subr.mxu0 0.0
        %221 = vmatpush2.msra.mxu0 0.0
        %222 = vmatprep.subr.mxu0 0.0
        %223 = vmatpush2.msra.mxu0 0.0
        %224 = vmatprep.mubr.f32.mxu0 0.0
        %v225 = vand.u32 %v153, 4294901760
        %v226 = vsub.f32 %v153, %v225
        %v227 = vand.u32 %v226, 4294901760
        %v228 = vsub.f32 %v226, %v227
        %v229 = vand.u32 %v228, 4294901760
        %230 = vmatmul.mubr.f32.gmra.mxu0 %v229
        %v231 = vpop.f32.mrf.mxu0
        %v232 = vadd.f32 0.0, %v231
        %v233 = vpop.f32.mrf.mxu0
        %v234 = vadd.f32 0.0, %v233
        %235 = vmatprep.mubr.f32.mxu0 0.0
        %v236 = vand.u32 %v156, 4294901760
        %v237 = vsub.f32 %v156, %v236
        %v238 = vand.u32 %v237, 4294901760
        %v239 = vsub.f32 %v237, %v238
        %v240 = vand.u32 %v239, 4294901760
        %241 = vmatmul.mubr.f32.gmra.mxu0 %v240
        %v242 = vpop.f32.mrf.mxu0
        %v243 = vadd.f32 0.0, %v242
        %v244 = vpop.f32.mrf.mxu0
        %v245 = vadd.f32 0.0, %v244
        %246 = vdwg.mxu0
        %247 = vmatprep.subr.mxu0 0.0
        %248 = vmatpush1.msra.mxu0 0.0
        %249 = vmatprep.subr.mxu0 0.0
        %250 = vmatpush1.msra.mxu0 0.0
        %251 = vmatprep.subr.mxu0 0.0
        %252 = vmatpush1.msra.mxu0 0.0
        %253 = vmatprep.subr.mxu0 0.0
        %254 = vmatpush1.msra.mxu0 0.0
        %255 = vmatprep.subr.mxu0 0.0
        %256 = vmatpush1.msra.mxu0 0.0
        %257 = vmatprep.subr.mxu0 0.0
        %258 = vmatpush1.msra.mxu0 0.0
        %259 = vmatprep.subr.mxu0 0.0
        %260 = vmatpush1.msra.mxu0 0.0
        %261 = vmatprep.subr.mxu0 0.0
        %262 = vmatpush1.msra.mxu0 0.0
        %263 = vmatprep.subr.mxu0 0.0
        %264 = vmatpush1.msra.mxu0 0.0
        %265 = vmatprep.subr.mxu0 0.0
        %266 = vmatpush1.msra.mxu0 0.0
        %267 = vmatprep.subr.mxu0 0.0
        %268 = vmatpush1.msra.mxu0 0.0
        %269 = vmatprep.subr.mxu0 0.0
        %270 = vmatpush1.msra.mxu0 0.0
        %271 = vmatprep.subr.mxu0 0.0
        %272 = vmatpush1.msra.mxu0 0.0
        %273 = vmatprep.subr.mxu0 0.0
        %274 = vmatpush1.msra.mxu0 0.0
        %275 = vmatprep.subr.mxu0 0.0
        %276 = vmatpush1.msra.mxu0 0.0
        %v277 = vand.u32 %v148, 4294901760
        %v278 = vsub.f32 %v148, %v277
        %v279 = vand.u32 %v278, 4294901760
        %v280 = vsub.f32 %v278, %v279
        %v281 = vand.u32 %v280, 4294901760
        %282 = vmatprep.subr.mxu0 %v281
        %v283 = vand.u32 %v147, 4294901760
        %v284 = vsub.f32 %v147, %v283
        %v285 = vand.u32 %v284, 4294901760
        %v286 = vsub.f32 %v284, %v285
        %v287 = vand.u32 %v286, 4294901760
        %288 = vmatpush1.msra.mxu0 %v287
        %289 = vmatprep.subr.mxu0 0.0
        %290 = vmatpush2.msra.mxu0 0.0
        %291 = vmatprep.subr.mxu0 0.0
        %292 = vmatpush2.msra.mxu0 0.0
        %293 = vmatprep.subr.mxu0 0.0
        %294 = vmatpush2.msra.mxu0 0.0
        %295 = vmatprep.subr.mxu0 0.0
        %296 = vmatpush2.msra.mxu0 0.0
        %297 = vmatprep.subr.mxu0 0.0
        %298 = vmatpush2.msra.mxu0 0.0
        %299 = vmatprep.subr.mxu0 0.0
        %300 = vmatpush2.msra.mxu0 0.0
        %301 = vmatprep.subr.mxu0 0.0
        %302 = vmatpush2.msra.mxu0 0.0
        %303 = vmatprep.subr.mxu0 0.0
        %304 = vmatpush2.msra.mxu0 0.0
        %305 = vmatprep.subr.mxu0 0.0
        %306 = vmatpush2.msra.mxu0 0.0
        %307 = vmatprep.subr.mxu0 0.0
        %308 = vmatpush2.msra.mxu0 0.0
        %309 = vmatprep.subr.mxu0 0.0
        %310 = vmatpush2.msra.mxu0 0.0
        %311 = vmatprep.subr.mxu0 0.0
        %312 = vmatpush2.msra.mxu0 0.0
        %313 = vmatprep.subr.mxu0 0.0
        %314 = vmatpush2.msra.mxu0 0.0
        %315 = vmatprep.subr.mxu0 0.0
        %316 = vmatpush2.msra.mxu0 0.0
        %317 = vmatprep.subr.mxu0 0.0
        %318 = vmatpush2.msra.mxu0 0.0
        %319 = vmatprep.subr.mxu0 0.0
        %320 = vmatpush2.msra.mxu0 0.0
        %321 = vmatprep.mubr.f32.mxu0 0.0
        %v322 = vand.u32 %v153, 4294901760
        %323 = vmatmul.mubr.f32.gmra.mxu0 %v322
        %v324 = vpop.f32.mrf.mxu0
        %v325 = vadd.f32 %v232, %v324
        %v326 = vpop.f32.mrf.mxu0
        %v327 = vadd.f32 %v234, %v326
        %328 = vmatprep.mubr.f32.mxu0 0.0
        %v329 = vand.u32 %v156, 4294901760
        %330 = vmatmul.mubr.f32.gmra.mxu0 %v329
        %v331 = vpop.f32.mrf.mxu0
        %v332 = vadd.f32 %v243, %v331
        %v333 = vpop.f32.mrf.mxu0
        %v334 = vadd.f32 %v245, %v333
        %335 = vdwg.mxu0
        %336 = vmatprep.subr.mxu0 0.0
        %337 = vmatpush1.msra.mxu0 0.0
        %338 = vmatprep.subr.mxu0 0.0
        %339 = vmatpush1.msra.mxu0 0.0
        %340 = vmatprep.subr.mxu0 0.0
        %341 = vmatpush1.msra.mxu0 0.0
        %342 = vmatprep.subr.mxu0 0.0
        %343 = vmatpush1.msra.mxu0 0.0
        %344 = vmatprep.subr.mxu0 0.0
        %345 = vmatpush1.msra.mxu0 0.0
        %346 = vmatprep.subr.mxu0 0.0
        %347 = vmatpush1.msra.mxu0 0.0
        %348 = vmatprep.subr.mxu0 0.0
        %349 = vmatpush1.msra.mxu0 0.0
        %350 = vmatprep.subr.mxu0 0.0
        %351 = vmatpush1.msra.mxu0 0.0
        %352 = vmatprep.subr.mxu0 0.0
        %353 = vmatpush1.msra.mxu0 0.0
        %354 = vmatprep.subr.mxu0 0.0
        %355 = vmatpush1.msra.mxu0 0.0
        %356 = vmatprep.subr.mxu0 0.0
        %357 = vmatpush1.msra.mxu0 0.0
        %358 = vmatprep.subr.mxu0 0.0
        %359 = vmatpush1.msra.mxu0 0.0
        %360 = vmatprep.subr.mxu0 0.0
        %361 = vmatpush1.msra.mxu0 0.0
        %362 = vmatprep.subr.mxu0 0.0
        %363 = vmatpush1.msra.mxu0 0.0
        %364 = vmatprep.subr.mxu0 0.0
        %365 = vmatpush1.msra.mxu0 0.0
        %v366 = vand.u32 %v148, 4294901760
        %v367 = vsub.f32 %v148, %v366
        %368 = vmatprep.subr.mxu0 %v367
        %v369 = vand.u32 %v147, 4294901760
        %v370 = vsub.f32 %v147, %v369
        %371 = vmatpush1.msra.mxu0 %v370
        %372 = vmatprep.subr.mxu0 0.0
        %373 = vmatpush2.msra.mxu0 0.0
        %374 = vmatprep.subr.mxu0 0.0
        %375 = vmatpush2.msra.mxu0 0.0
        %376 = vmatprep.subr.mxu0 0.0
        %377 = vmatpush2.msra.mxu0 0.0
        %378 = vmatprep.subr.mxu0 0.0
        %379 = vmatpush2.msra.mxu0 0.0
        %380 = vmatprep.subr.mxu0 0.0
        %381 = vmatpush2.msra.mxu0 0.0
        %382 = vmatprep.subr.mxu0 0.0
        %383 = vmatpush2.msra.mxu0 0.0
        %384 = vmatprep.subr.mxu0 0.0
        %385 = vmatpush2.msra.mxu0 0.0
        %386 = vmatprep.subr.mxu0 0.0
        %387 = vmatpush2.msra.mxu0 0.0
        %388 = vmatprep.subr.mxu0 0.0
        %389 = vmatpush2.msra.mxu0 0.0
        %390 = vmatprep.subr.mxu0 0.0
        %391 = vmatpush2.msra.mxu0 0.0
        %392 = vmatprep.subr.mxu0 0.0
        %393 = vmatpush2.msra.mxu0 0.0
        %394 = vmatprep.subr.mxu0 0.0
        %395 = vmatpush2.msra.mxu0 0.0
        %396 = vmatprep.subr.mxu0 0.0
        %397 = vmatpush2.msra.mxu0 0.0
        %398 = vmatprep.subr.mxu0 0.0
        %399 = vmatpush2.msra.mxu0 0.0
        %400 = vmatprep.subr.mxu0 0.0
        %401 = vmatpush2.msra.mxu0 0.0
        %402 = vmatprep.subr.mxu0 0.0
        %403 = vmatpush2.msra.mxu0 0.0
        %404 = vmatprep.mubr.f32.mxu0 0.0
        %v405 = vand.u32 %v153, 4294901760
        %v406 = vsub.f32 %v153, %v405
        %407 = vmatmul.mubr.f32.gmra.mxu0 %v406
        %v408 = vpop.f32.mrf.mxu0
        %v409 = vadd.f32 %v325, %v408
        %v410 = vpop.f32.mrf.mxu0
        %v411 = vadd.f32 %v327, %v410
        %412 = vmatprep.mubr.f32.mxu0 0.0
        %v413 = vand.u32 %v156, 4294901760
        %v414 = vsub.f32 %v156, %v413
        %415 = vmatmul.mubr.f32.gmra.mxu0 %v414
        %v416 = vpop.f32.mrf.mxu0
        %v417 = vadd.f32 %v332, %v416
        %v418 = vpop.f32.mrf.mxu0
        %v419 = vadd.f32 %v334, %v418
        %420 = vdwg.mxu0
        %421 = vmatprep.subr.mxu0 0.0
        %422 = vmatpush1.msra.mxu0 0.0
        %423 = vmatprep.subr.mxu0 0.0
        %424 = vmatpush1.msra.mxu0 0.0
        %425 = vmatprep.subr.mxu0 0.0
        %426 = vmatpush1.msra.mxu0 0.0
        %427 = vmatprep.subr.mxu0 0.0
        %428 = vmatpush1.msra.mxu0 0.0
        %429 = vmatprep.subr.mxu0 0.0
        %430 = vmatpush1.msra.mxu0 0.0
        %431 = vmatprep.subr.mxu0 0.0
        %432 = vmatpush1.msra.mxu0 0.0
        %433 = vmatprep.subr.mxu0 0.0
        %434 = vmatpush1.msra.mxu0 0.0
        %435 = vmatprep.subr.mxu0 0.0
        %436 = vmatpush1.msra.mxu0 0.0
        %437 = vmatprep.subr.mxu0 0.0
        %438 = vmatpush1.msra.mxu0 0.0
        %439 = vmatprep.subr.mxu0 0.0
        %440 = vmatpush1.msra.mxu0 0.0
        %441 = vmatprep.subr.mxu0 0.0
        %442 = vmatpush1.msra.mxu0 0.0
        %443 = vmatprep.subr.mxu0 0.0
        %444 = vmatpush1.msra.mxu0 0.0
        %445 = vmatprep.subr.mxu0 0.0
        %446 = vmatpush1.msra.mxu0 0.0
        %447 = vmatprep.subr.mxu0 0.0
        %448 = vmatpush1.msra.mxu0 0.0
        %449 = vmatprep.subr.mxu0 0.0
        %450 = vmatpush1.msra.mxu0 0.0
        %v451 = vand.u32 %v148, 4294901760
        %452 = vmatprep.subr.mxu0 %v451
        %v453 = vand.u32 %v147, 4294901760
        %454 = vmatpush1.msra.mxu0 %v453
        %455 = vmatprep.subr.mxu0 0.0
        %456 = vmatpush2.msra.mxu0 0.0
        %457 = vmatprep.subr.mxu0 0.0
        %458 = vmatpush2.msra.mxu0 0.0
        %459 = vmatprep.subr.mxu0 0.0
        %460 = vmatpush2.msra.mxu0 0.0
        %461 = vmatprep.subr.mxu0 0.0
        %462 = vmatpush2.msra.mxu0 0.0
        %463 = vmatprep.subr.mxu0 0.0
        %464 = vmatpush2.msra.mxu0 0.0
        %465 = vmatprep.subr.mxu0 0.0
        %466 = vmatpush2.msra.mxu0 0.0
        %467 = vmatprep.subr.mxu0 0.0
        %468 = vmatpush2.msra.mxu0 0.0
        %469 = vmatprep.subr.mxu0 0.0
        %470 = vmatpush2.msra.mxu0 0.0
        %471 = vmatprep.subr.mxu0 0.0
        %472 = vmatpush2.msra.mxu0 0.0
        %473 = vmatprep.subr.mxu0 0.0
        %474 = vmatpush2.msra.mxu0 0.0
        %475 = vmatprep.subr.mxu0 0.0
        %476 = vmatpush2.msra.mxu0 0.0
        %477 = vmatprep.subr.mxu0 0.0
        %478 = vmatpush2.msra.mxu0 0.0
        %479 = vmatprep.subr.mxu0 0.0
        %480 = vmatpush2.msra.mxu0 0.0
        %481 = vmatprep.subr.mxu0 0.0
        %482 = vmatpush2.msra.mxu0 0.0
        %483 = vmatprep.subr.mxu0 0.0
        %484 = vmatpush2.msra.mxu0 0.0
        %485 = vmatprep.subr.mxu0 0.0
        %486 = vmatpush2.msra.mxu0 0.0
        %487 = vmatprep.mubr.f32.mxu0 0.0
        %v488 = vand.u32 %v153, 4294901760
        %v489 = vsub.f32 %v153, %v488
        %v490 = vand.u32 %v489, 4294901760
        %491 = vmatmul.mubr.f32.gmra.mxu0 %v490
        %v492 = vpop.f32.mrf.mxu0
        %v493 = vadd.f32 %v409, %v492
        %v494 = vpop.f32.mrf.mxu0
        %v495 = vadd.f32 %v411, %v494
        %496 = vmatprep.mubr.f32.mxu0 0.0
        %v497 = vand.u32 %v156, 4294901760
        %v498 = vsub.f32 %v156, %v497
        %v499 = vand.u32 %v498, 4294901760
        %500 = vmatmul.mubr.f32.gmra.mxu0 %v499
        %v501 = vpop.f32.mrf.mxu0
        %v502 = vadd.f32 %v417, %v501
        %v503 = vpop.f32.mrf.mxu0
        %v504 = vadd.f32 %v419, %v503
        %505 = vdwg.mxu0
        %506 = vmatprep.subr.mxu0 0.0
        %507 = vmatpush1.msra.mxu0 0.0
        %508 = vmatprep.subr.mxu0 0.0
        %509 = vmatpush1.msra.mxu0 0.0
        %510 = vmatprep.subr.mxu0 0.0
        %511 = vmatpush1.msra.mxu0 0.0
        %512 = vmatprep.subr.mxu0 0.0
        %513 = vmatpush1.msra.mxu0 0.0
        %514 = vmatprep.subr.mxu0 0.0
        %515 = vmatpush1.msra.mxu0 0.0
        %516 = vmatprep.subr.mxu0 0.0
        %517 = vmatpush1.msra.mxu0 0.0
        %518 = vmatprep.subr.mxu0 0.0
        %519 = vmatpush1.msra.mxu0 0.0
        %520 = vmatprep.subr.mxu0 0.0
        %521 = vmatpush1.msra.mxu0 0.0
        %522 = vmatprep.subr.mxu0 0.0
        %523 = vmatpush1.msra.mxu0 0.0
        %524 = vmatprep.subr.mxu0 0.0
        %525 = vmatpush1.msra.mxu0 0.0
        %526 = vmatprep.subr.mxu0 0.0
        %527 = vmatpush1.msra.mxu0 0.0
        %528 = vmatprep.subr.mxu0 0.0
        %529 = vmatpush1.msra.mxu0 0.0
        %530 = vmatprep.subr.mxu0 0.0
        %531 = vmatpush1.msra.mxu0 0.0
        %532 = vmatprep.subr.mxu0 0.0
        %533 = vmatpush1.msra.mxu0 0.0
        %534 = vmatprep.subr.mxu0 0.0
        %535 = vmatpush1.msra.mxu0 0.0
        %v536 = vand.u32 %v148, 4294901760
        %v537 = vsub.f32 %v148, %v536
        %v538 = vand.u32 %v537, 4294901760
        %539 = vmatprep.subr.mxu0 %v538
        %v540 = vand.u32 %v147, 4294901760
        %v541 = vsub.f32 %v147, %v540
        %v542 = vand.u32 %v541, 4294901760
        %543 = vmatpush1.msra.mxu0 %v542
        %544 = vmatprep.subr.mxu0 0.0
        %545 = vmatpush2.msra.mxu0 0.0
        %546 = vmatprep.subr.mxu0 0.0
        %547 = vmatpush2.msra.mxu0 0.0
        %548 = vmatprep.subr.mxu0 0.0
        %549 = vmatpush2.msra.mxu0 0.0
        %550 = vmatprep.subr.mxu0 0.0
        %551 = vmatpush2.msra.mxu0 0.0
        %552 = vmatprep.subr.mxu0 0.0
        %553 = vmatpush2.msra.mxu0 0.0
        %554 = vmatprep.subr.mxu0 0.0
        %555 = vmatpush2.msra.mxu0 0.0
        %556 = vmatprep.subr.mxu0 0.0
        %557 = vmatpush2.msra.mxu0 0.0
        %558 = vmatprep.subr.mxu0 0.0
        %559 = vmatpush2.msra.mxu0 0.0
        %560 = vmatprep.subr.mxu0 0.0
        %561 = vmatpush2.msra.mxu0 0.0
        %562 = vmatprep.subr.mxu0 0.0
        %563 = vmatpush2.msra.mxu0 0.0
        %564 = vmatprep.subr.mxu0 0.0
        %565 = vmatpush2.msra.mxu0 0.0
        %566 = vmatprep.subr.mxu0 0.0
        %567 = vmatpush2.msra.mxu0 0.0
        %568 = vmatprep.subr.mxu0 0.0
        %569 = vmatpush2.msra.mxu0 0.0
        %570 = vmatprep.subr.mxu0 0.0
        %571 = vmatpush2.msra.mxu0 0.0
        %572 = vmatprep.subr.mxu0 0.0
        %573 = vmatpush2.msra.mxu0 0.0
        %574 = vmatprep.subr.mxu0 0.0
        %575 = vmatpush2.msra.mxu0 0.0
        %576 = vmatprep.mubr.f32.mxu0 0.0
        %v577 = vand.u32 %v153, 4294901760
        %578 = vmatmul.mubr.f32.gmra.mxu0 %v577
        %v579 = vpop.f32.mrf.mxu0
        %v580 = vadd.f32 %v493, %v579
        %v581 = vpop.f32.mrf.mxu0
        %v582 = vadd.f32 %v495, %v581
        %583 = vmatprep.mubr.f32.mxu0 0.0
        %v584 = vand.u32 %v156, 4294901760
        %585 = vmatmul.mubr.f32.gmra.mxu0 %v584
        %v586 = vpop.f32.mrf.mxu0
        %v587 = vadd.f32 %v502, %v586
        %v588 = vpop.f32.mrf.mxu0
        %v589 = vadd.f32 %v504, %v588
        %590 = vdwg.mxu0
        %591 = vmatprep.subr.mxu0 0.0
        %592 = vmatpush1.msra.mxu0 0.0
        %593 = vmatprep.subr.mxu0 0.0
        %594 = vmatpush1.msra.mxu0 0.0
        %595 = vmatprep.subr.mxu0 0.0
        %596 = vmatpush1.msra.mxu0 0.0
        %597 = vmatprep.subr.mxu0 0.0
        %598 = vmatpush1.msra.mxu0 0.0
        %599 = vmatprep.subr.mxu0 0.0
        %600 = vmatpush1.msra.mxu0 0.0
        %601 = vmatprep.subr.mxu0 0.0
        %602 = vmatpush1.msra.mxu0 0.0
        %603 = vmatprep.subr.mxu0 0.0
        %604 = vmatpush1.msra.mxu0 0.0
        %605 = vmatprep.subr.mxu0 0.0
        %606 = vmatpush1.msra.mxu0 0.0
        %607 = vmatprep.subr.mxu0 0.0
        %608 = vmatpush1.msra.mxu0 0.0
        %609 = vmatprep.subr.mxu0 0.0
        %610 = vmatpush1.msra.mxu0 0.0
        %611 = vmatprep.subr.mxu0 0.0
        %612 = vmatpush1.msra.mxu0 0.0
        %613 = vmatprep.subr.mxu0 0.0
        %614 = vmatpush1.msra.mxu0 0.0
        %615 = vmatprep.subr.mxu0 0.0
        %616 = vmatpush1.msra.mxu0 0.0
        %617 = vmatprep.subr.mxu0 0.0
        %618 = vmatpush1.msra.mxu0 0.0
        %619 = vmatprep.subr.mxu0 0.0
        %620 = vmatpush1.msra.mxu0 0.0
        %v621 = vand.u32 %v148, 4294901760
        %622 = vmatprep.subr.mxu0 %v621
        %v623 = vand.u32 %v147, 4294901760
        %624 = vmatpush1.msra.mxu0 %v623
        %625 = vmatprep.subr.mxu0 0.0
        %626 = vmatpush2.msra.mxu0 0.0
        %627 = vmatprep.subr.mxu0 0.0
        %628 = vmatpush2.msra.mxu0 0.0
        %629 = vmatprep.subr.mxu0 0.0
        %630 = vmatpush2.msra.mxu0 0.0
        %631 = vmatprep.subr.mxu0 0.0
        %632 = vmatpush2.msra.mxu0 0.0
        %633 = vmatprep.subr.mxu0 0.0
        %634 = vmatpush2.msra.mxu0 0.0
        %635 = vmatprep.subr.mxu0 0.0
        %636 = vmatpush2.msra.mxu0 0.0
        %637 = vmatprep.subr.mxu0 0.0
        %638 = vmatpush2.msra.mxu0 0.0
        %639 = vmatprep.subr.mxu0 0.0
        %640 = vmatpush2.msra.mxu0 0.0
        %641 = vmatprep.subr.mxu0 0.0
        %642 = vmatpush2.msra.mxu0 0.0
        %643 = vmatprep.subr.mxu0 0.0
        %644 = vmatpush2.msra.mxu0 0.0
        %645 = vmatprep.subr.mxu0 0.0
        %646 = vmatpush2.msra.mxu0 0.0
        %647 = vmatprep.subr.mxu0 0.0
        %648 = vmatpush2.msra.mxu0 0.0
        %649 = vmatprep.subr.mxu0 0.0
        %650 = vmatpush2.msra.mxu0 0.0
        %651 = vmatprep.subr.mxu0 0.0
        %652 = vmatpush2.msra.mxu0 0.0
        %653 = vmatprep.subr.mxu0 0.0
        %654 = vmatpush2.msra.mxu0 0.0
        %655 = vmatprep.subr.mxu0 0.0
        %656 = vmatpush2.msra.mxu0 0.0
        %657 = vmatprep.mubr.f32.mxu0 0.0
        %v658 = vand.u32 %v153, 4294901760
        %659 = vmatmul.mubr.f32.gmra.mxu0 %v658
        %v660 = vpop.f32.mrf.mxu0
        %v661 = vadd.f32 %v580, %v660
        %v662 = vpop.f32.mrf.mxu0
        %v663 = vadd.f32 %v582, %v662
        %664 = vmatprep.mubr.f32.mxu0 0.0
        %v665 = vand.u32 %v156, 4294901760
        %666 = vmatmul.mubr.f32.gmra.mxu0 %v665
        %v667 = vpop.f32.mrf.mxu0
        %v668 = vadd.f32 %v587, %v667
        %v669 = vpop.f32.mrf.mxu0
        %v670 = vadd.f32 %v589, %v669
        %671 = vdwg.mxu0
        %672 = vmatprep.subr.mxu0 0.0
        %673 = vmatpush1.msra.mxu0 0.0
        %674 = vmatprep.subr.mxu0 0.0
        %675 = vmatpush1.msra.mxu0 0.0
        %676 = vmatprep.subr.mxu0 0.0
        %677 = vmatpush1.msra.mxu0 0.0
        %678 = vmatprep.subr.mxu0 0.0
        %679 = vmatpush1.msra.mxu0 0.0
        %680 = vmatprep.subr.mxu0 0.0
        %681 = vmatpush1.msra.mxu0 0.0
        %682 = vmatprep.subr.mxu0 0.0
        %683 = vmatpush1.msra.mxu0 0.0
        %684 = vmatprep.subr.mxu0 0.0
        %685 = vmatpush1.msra.mxu0 0.0
        %686 = vmatprep.subr.mxu0 0.0
        %687 = vmatpush1.msra.mxu0 0.0
        %688 = vmatprep.subr.mxu0 0.0
        %689 = vmatpush1.msra.mxu0 0.0
        %690 = vmatprep.subr.mxu0 0.0
        %691 = vmatpush1.msra.mxu0 0.0
        %692 = vmatprep.subr.mxu0 0.0
        %693 = vmatpush1.msra.mxu0 0.0
        %694 = vmatprep.subr.mxu0 0.0
        %695 = vmatpush1.msra.mxu0 0.0
        %696 = vmatprep.subr.mxu0 0.0
        %697 = vmatpush1.msra.mxu0 0.0
        %698 = vmatprep.subr.mxu0 0.0
        %699 = vmatpush1.msra.mxu0 0.0
        %700 = vmatprep.subr.mxu0 0.0
        %701 = vmatpush1.msra.mxu0 0.0
        %v702 = vand.u32 %v150, 4294901760
        %703 = vmatprep.subr.mxu0 %v702
        %v704 = vand.u32 %v149, 4294901760
        %705 = vmatpush1.msra.mxu0 %v704
        %706 = vmatprep.subr.mxu0 0.0
        %707 = vmatpush2.msra.mxu0 0.0
        %708 = vmatprep.subr.mxu0 0.0
        %709 = vmatpush2.msra.mxu0 0.0
        %710 = vmatprep.subr.mxu0 0.0
        %711 = vmatpush2.msra.mxu0 0.0
        %712 = vmatprep.subr.mxu0 0.0
        %713 = vmatpush2.msra.mxu0 0.0
        %714 = vmatprep.subr.mxu0 0.0
        %715 = vmatpush2.msra.mxu0 0.0
        %716 = vmatprep.subr.mxu0 0.0
        %717 = vmatpush2.msra.mxu0 0.0
        %718 = vmatprep.subr.mxu0 0.0
        %719 = vmatpush2.msra.mxu0 0.0
        %720 = vmatprep.subr.mxu0 0.0
        %721 = vmatpush2.msra.mxu0 0.0
        %722 = vmatprep.subr.mxu0 0.0
        %723 = vmatpush2.msra.mxu0 0.0
        %724 = vmatprep.subr.mxu0 0.0
        %725 = vmatpush2.msra.mxu0 0.0
        %726 = vmatprep.subr.mxu0 0.0
        %727 = vmatpush2.msra.mxu0 0.0
        %728 = vmatprep.subr.mxu0 0.0
        %729 = vmatpush2.msra.mxu0 0.0
        %730 = vmatprep.subr.mxu0 0.0
        %731 = vmatpush2.msra.mxu0 0.0
        %732 = vmatprep.subr.mxu0 0.0
        %733 = vmatpush2.msra.mxu0 0.0
        %734 = vmatprep.subr.mxu0 0.0
        %735 = vmatpush2.msra.mxu0 0.0
        %736 = vmatprep.subr.mxu0 0.0
        %737 = vmatpush2.msra.mxu0 0.0
        %738 = vmatprep.mubr.f32.mxu0 0.0
        %v739 = vand.u32 %v153, 4294901760
        %v740 = vsub.f32 %v153, %v739
        %v741 = vand.u32 %v740, 4294901760
        %v742 = vsub.f32 %v740, %v741
        %v743 = vand.u32 %v742, 4294901760
        %744 = vmatmul.mubr.f32.gmra.mxu0 %v743
        %v745 = vpop.f32.mrf.mxu0
        %v746 = vadd.f32 0.0, %v745
        %v747 = vpop.f32.mrf.mxu0
        %v748 = vadd.f32 0.0, %v747
        %749 = vmatprep.mubr.f32.mxu0 0.0
        %v750 = vand.u32 %v156, 4294901760
        %v751 = vsub.f32 %v156, %v750
        %v752 = vand.u32 %v751, 4294901760
        %v753 = vsub.f32 %v751, %v752
        %v754 = vand.u32 %v753, 4294901760
        %755 = vmatmul.mubr.f32.gmra.mxu0 %v754
        %v756 = vpop.f32.mrf.mxu0
        %v757 = vadd.f32 0.0, %v756
        %v758 = vpop.f32.mrf.mxu0
        %v759 = vadd.f32 0.0, %v758
        %760 = vdwg.mxu0
        %761 = vmatprep.subr.mxu0 0.0
        %762 = vmatpush1.msra.mxu0 0.0
        %763 = vmatprep.subr.mxu0 0.0
        %764 = vmatpush1.msra.mxu0 0.0
        %765 = vmatprep.subr.mxu0 0.0
        %766 = vmatpush1.msra.mxu0 0.0
        %767 = vmatprep.subr.mxu0 0.0
        %768 = vmatpush1.msra.mxu0 0.0
        %769 = vmatprep.subr.mxu0 0.0
        %770 = vmatpush1.msra.mxu0 0.0
        %771 = vmatprep.subr.mxu0 0.0
        %772 = vmatpush1.msra.mxu0 0.0
        %773 = vmatprep.subr.mxu0 0.0
        %774 = vmatpush1.msra.mxu0 0.0
        %775 = vmatprep.subr.mxu0 0.0
        %776 = vmatpush1.msra.mxu0 0.0
        %777 = vmatprep.subr.mxu0 0.0
        %778 = vmatpush1.msra.mxu0 0.0
        %779 = vmatprep.subr.mxu0 0.0
        %780 = vmatpush1.msra.mxu0 0.0
        %781 = vmatprep.subr.mxu0 0.0
        %782 = vmatpush1.msra.mxu0 0.0
        %783 = vmatprep.subr.mxu0 0.0
        %784 = vmatpush1.msra.mxu0 0.0
        %785 = vmatprep.subr.mxu0 0.0
        %786 = vmatpush1.msra.mxu0 0.0
        %787 = vmatprep.subr.mxu0 0.0
        %788 = vmatpush1.msra.mxu0 0.0
        %789 = vmatprep.subr.mxu0 0.0
        %790 = vmatpush1.msra.mxu0 0.0
        %v791 = vand.u32 %v150, 4294901760
        %v792 = vsub.f32 %v150, %v791
        %v793 = vand.u32 %v792, 4294901760
        %v794 = vsub.f32 %v792, %v793
        %v795 = vand.u32 %v794, 4294901760
        %796 = vmatprep.subr.mxu0 %v795
        %v797 = vand.u32 %v149, 4294901760
        %v798 = vsub.f32 %v149, %v797
        %v799 = vand.u32 %v798, 4294901760
        %v800 = vsub.f32 %v798, %v799
        %v801 = vand.u32 %v800, 4294901760
        %802 = vmatpush1.msra.mxu0 %v801
        %803 = vmatprep.subr.mxu0 0.0
        %804 = vmatpush2.msra.mxu0 0.0
        %805 = vmatprep.subr.mxu0 0.0
        %806 = vmatpush2.msra.mxu0 0.0
        %807 = vmatprep.subr.mxu0 0.0
        %808 = vmatpush2.msra.mxu0 0.0
        %809 = vmatprep.subr.mxu0 0.0
        %810 = vmatpush2.msra.mxu0 0.0
        %811 = vmatprep.subr.mxu0 0.0
        %812 = vmatpush2.msra.mxu0 0.0
        %813 = vmatprep.subr.mxu0 0.0
        %814 = vmatpush2.msra.mxu0 0.0
        %815 = vmatprep.subr.mxu0 0.0
        %816 = vmatpush2.msra.mxu0 0.0
        %817 = vmatprep.subr.mxu0 0.0
        %818 = vmatpush2.msra.mxu0 0.0
        %819 = vmatprep.subr.mxu0 0.0
        %820 = vmatpush2.msra.mxu0 0.0
        %821 = vmatprep.subr.mxu0 0.0
        %822 = vmatpush2.msra.mxu0 0.0
        %823 = vmatprep.subr.mxu0 0.0
        %824 = vmatpush2.msra.mxu0 0.0
        %825 = vmatprep.subr.mxu0 0.0
        %826 = vmatpush2.msra.mxu0 0.0
        %827 = vmatprep.subr.mxu0 0.0
        %828 = vmatpush2.msra.mxu0 0.0
        %829 = vmatprep.subr.mxu0 0.0
        %830 = vmatpush2.msra.mxu0 0.0
        %831 = vmatprep.subr.mxu0 0.0
        %832 = vmatpush2.msra.mxu0 0.0
        %833 = vmatprep.subr.mxu0 0.0
        %834 = vmatpush2.msra.mxu0 0.0
        %835 = vmatprep.mubr.f32.mxu0 0.0
        %v836 = vand.u32 %v153, 4294901760
        %837 = vmatmul.mubr.f32.gmra.mxu0 %v836
        %v838 = vpop.f32.mrf.mxu0
        %v839 = vadd.f32 %v746, %v838
        %v840 = vpop.f32.mrf.mxu0
        %v841 = vadd.f32 %v748, %v840
        %842 = vmatprep.mubr.f32.mxu0 0.0
        %v843 = vand.u32 %v156, 4294901760
        %844 = vmatmul.mubr.f32.gmra.mxu0 %v843
        %v845 = vpop.f32.mrf.mxu0
        %v846 = vadd.f32 %v757, %v845
        %v847 = vpop.f32.mrf.mxu0
        %v848 = vadd.f32 %v759, %v847
        %849 = vdwg.mxu0
        %850 = vmatprep.subr.mxu0 0.0
        %851 = vmatpush1.msra.mxu0 0.0
        %852 = vmatprep.subr.mxu0 0.0
        %853 = vmatpush1.msra.mxu0 0.0
        %854 = vmatprep.subr.mxu0 0.0
        %855 = vmatpush1.msra.mxu0 0.0
        %856 = vmatprep.subr.mxu0 0.0
        %857 = vmatpush1.msra.mxu0 0.0
        %858 = vmatprep.subr.mxu0 0.0
        %859 = vmatpush1.msra.mxu0 0.0
        %860 = vmatprep.subr.mxu0 0.0
        %861 = vmatpush1.msra.mxu0 0.0
        %862 = vmatprep.subr.mxu0 0.0
        %863 = vmatpush1.msra.mxu0 0.0
        %864 = vmatprep.subr.mxu0 0.0
        %865 = vmatpush1.msra.mxu0 0.0
        %866 = vmatprep.subr.mxu0 0.0
        %867 = vmatpush1.msra.mxu0 0.0
        %868 = vmatprep.subr.mxu0 0.0
        %869 = vmatpush1.msra.mxu0 0.0
        %870 = vmatprep.subr.mxu0 0.0
        %871 = vmatpush1.msra.mxu0 0.0
        %872 = vmatprep.subr.mxu0 0.0
        %873 = vmatpush1.msra.mxu0 0.0
        %874 = vmatprep.subr.mxu0 0.0
        %875 = vmatpush1.msra.mxu0 0.0
        %876 = vmatprep.subr.mxu0 0.0
        %877 = vmatpush1.msra.mxu0 0.0
        %878 = vmatprep.subr.mxu0 0.0
        %879 = vmatpush1.msra.mxu0 0.0
        %v880 = vand.u32 %v150, 4294901760
        %v881 = vsub.f32 %v150, %v880
        %882 = vmatprep.subr.mxu0 %v881
        %v883 = vand.u32 %v149, 4294901760
        %v884 = vsub.f32 %v149, %v883
        %885 = vmatpush1.msra.mxu0 %v884
        %886 = vmatprep.subr.mxu0 0.0
        %887 = vmatpush2.msra.mxu0 0.0
        %888 = vmatprep.subr.mxu0 0.0
        %889 = vmatpush2.msra.mxu0 0.0
        %890 = vmatprep.subr.mxu0 0.0
        %891 = vmatpush2.msra.mxu0 0.0
        %892 = vmatprep.subr.mxu0 0.0
        %893 = vmatpush2.msra.mxu0 0.0
        %894 = vmatprep.subr.mxu0 0.0
        %895 = vmatpush2.msra.mxu0 0.0
        %896 = vmatprep.subr.mxu0 0.0
        %897 = vmatpush2.msra.mxu0 0.0
        %898 = vmatprep.subr.mxu0 0.0
        %899 = vmatpush2.msra.mxu0 0.0
        %900 = vmatprep.subr.mxu0 0.0
        %901 = vmatpush2.msra.mxu0 0.0
        %902 = vmatprep.subr.mxu0 0.0
        %903 = vmatpush2.msra.mxu0 0.0
        %904 = vmatprep.subr.mxu0 0.0
        %905 = vmatpush2.msra.mxu0 0.0
        %906 = vmatprep.subr.mxu0 0.0
        %907 = vmatpush2.msra.mxu0 0.0
        %908 = vmatprep.subr.mxu0 0.0
        %909 = vmatpush2.msra.mxu0 0.0
        %910 = vmatprep.subr.mxu0 0.0
        %911 = vmatpush2.msra.mxu0 0.0
        %912 = vmatprep.subr.mxu0 0.0
        %913 = vmatpush2.msra.mxu0 0.0
        %914 = vmatprep.subr.mxu0 0.0
        %915 = vmatpush2.msra.mxu0 0.0
        %916 = vmatprep.subr.mxu0 0.0
        %917 = vmatpush2.msra.mxu0 0.0
        %918 = vmatprep.mubr.f32.mxu0 0.0
        %v919 = vand.u32 %v153, 4294901760
        %v920 = vsub.f32 %v153, %v919
        %921 = vmatmul.mubr.f32.gmra.mxu0 %v920
        %v922 = vpop.f32.mrf.mxu0
        %v923 = vadd.f32 %v839, %v922
        %v924 = vpop.f32.mrf.mxu0
        %v925 = vadd.f32 %v841, %v924
        %926 = vmatprep.mubr.f32.mxu0 0.0
        %v927 = vand.u32 %v156, 4294901760
        %v928 = vsub.f32 %v156, %v927
        %929 = vmatmul.mubr.f32.gmra.mxu0 %v928
        %v930 = vpop.f32.mrf.mxu0
        %v931 = vadd.f32 %v846, %v930
        %v932 = vpop.f32.mrf.mxu0
        %v933 = vadd.f32 %v848, %v932
        %934 = vdwg.mxu0
        %935 = vmatprep.subr.mxu0 0.0
        %936 = vmatpush1.msra.mxu0 0.0
        %937 = vmatprep.subr.mxu0 0.0
        %938 = vmatpush1.msra.mxu0 0.0
        %939 = vmatprep.subr.mxu0 0.0
        %940 = vmatpush1.msra.mxu0 0.0
        %941 = vmatprep.subr.mxu0 0.0
        %942 = vmatpush1.msra.mxu0 0.0
        %943 = vmatprep.subr.mxu0 0.0
        %944 = vmatpush1.msra.mxu0 0.0
        %945 = vmatprep.subr.mxu0 0.0
        %946 = vmatpush1.msra.mxu0 0.0
        %947 = vmatprep.subr.mxu0 0.0
        %948 = vmatpush1.msra.mxu0 0.0
        %949 = vmatprep.subr.mxu0 0.0
        %950 = vmatpush1.msra.mxu0 0.0
        %951 = vmatprep.subr.mxu0 0.0
        %952 = vmatpush1.msra.mxu0 0.0
        %953 = vmatprep.subr.mxu0 0.0
        %954 = vmatpush1.msra.mxu0 0.0
        %955 = vmatprep.subr.mxu0 0.0
        %956 = vmatpush1.msra.mxu0 0.0
        %957 = vmatprep.subr.mxu0 0.0
        %958 = vmatpush1.msra.mxu0 0.0
        %959 = vmatprep.subr.mxu0 0.0
        %960 = vmatpush1.msra.mxu0 0.0
        %961 = vmatprep.subr.mxu0 0.0
        %962 = vmatpush1.msra.mxu0 0.0
        %963 = vmatprep.subr.mxu0 0.0
        %964 = vmatpush1.msra.mxu0 0.0
        %v965 = vand.u32 %v150, 4294901760
        %966 = vmatprep.subr.mxu0 %v965
        %v967 = vand.u32 %v149, 4294901760
        %968 = vmatpush1.msra.mxu0 %v967
        %969 = vmatprep.subr.mxu0 0.0
        %970 = vmatpush2.msra.mxu0 0.0
        %971 = vmatprep.subr.mxu0 0.0
        %972 = vmatpush2.msra.mxu0 0.0
        %973 = vmatprep.subr.mxu0 0.0
        %974 = vmatpush2.msra.mxu0 0.0
        %975 = vmatprep.subr.mxu0 0.0
        %976 = vmatpush2.msra.mxu0 0.0
        %977 = vmatprep.subr.mxu0 0.0
        %978 = vmatpush2.msra.mxu0 0.0
        %979 = vmatprep.subr.mxu0 0.0
        %980 = vmatpush2.msra.mxu0 0.0
        %981 = vmatprep.subr.mxu0 0.0
        %982 = vmatpush2.msra.mxu0 0.0
        %983 = vmatprep.subr.mxu0 0.0
        %984 = vmatpush2.msra.mxu0 0.0
        %985 = vmatprep.subr.mxu0 0.0
        %986 = vmatpush2.msra.mxu0 0.0
        %987 = vmatprep.subr.mxu0 0.0
        %988 = vmatpush2.msra.mxu0 0.0
        %989 = vmatprep.subr.mxu0 0.0
        %990 = vmatpush2.msra.mxu0 0.0
        %991 = vmatprep.subr.mxu0 0.0
        %992 = vmatpush2.msra.mxu0 0.0
        %993 = vmatprep.subr.mxu0 0.0
        %994 = vmatpush2.msra.mxu0 0.0
        %995 = vmatprep.subr.mxu0 0.0
        %996 = vmatpush2.msra.mxu0 0.0
        %997 = vmatprep.subr.mxu0 0.0
        %998 = vmatpush2.msra.mxu0 0.0
        %999 = vmatprep.subr.mxu0 0.0
        %1000 = vmatpush2.msra.mxu0 0.0
        %1001 = vmatprep.mubr.f32.mxu0 0.0
        %v1002 = vand.u32 %v153, 4294901760
        %v1003 = vsub.f32 %v153, %v1002
        %v1004 = vand.u32 %v1003, 4294901760
        %1005 = vmatmul.mubr.f32.gmra.mxu0 %v1004
        %v1006 = vpop.f32.mrf.mxu0
        %v1007 = vadd.f32 %v923, %v1006
        %v1008 = vpop.f32.mrf.mxu0
        %v1009 = vadd.f32 %v925, %v1008
        %1010 = vmatprep.mubr.f32.mxu0 0.0
        %v1011 = vand.u32 %v156, 4294901760
        %v1012 = vsub.f32 %v156, %v1011
        %v1013 = vand.u32 %v1012, 4294901760
        %1014 = vmatmul.mubr.f32.gmra.mxu0 %v1013
        %v1015 = vpop.f32.mrf.mxu0
        %v1016 = vadd.f32 %v931, %v1015
        %v1017 = vpop.f32.mrf.mxu0
        %v1018 = vadd.f32 %v933, %v1017
        %1019 = vdwg.mxu0
        %1020 = vmatprep.subr.mxu0 0.0
        %1021 = vmatpush1.msra.mxu0 0.0
        %1022 = vmatprep.subr.mxu0 0.0
        %1023 = vmatpush1.msra.mxu0 0.0
        %1024 = vmatprep.subr.mxu0 0.0
        %1025 = vmatpush1.msra.mxu0 0.0
        %1026 = vmatprep.subr.mxu0 0.0
        %1027 = vmatpush1.msra.mxu0 0.0
        %1028 = vmatprep.subr.mxu0 0.0
        %1029 = vmatpush1.msra.mxu0 0.0
        %1030 = vmatprep.subr.mxu0 0.0
        %1031 = vmatpush1.msra.mxu0 0.0
        %1032 = vmatprep.subr.mxu0 0.0
        %1033 = vmatpush1.msra.mxu0 0.0
        %1034 = vmatprep.subr.mxu0 0.0
        %1035 = vmatpush1.msra.mxu0 0.0
        %1036 = vmatprep.subr.mxu0 0.0
        %1037 = vmatpush1.msra.mxu0 0.0
        %1038 = vmatprep.subr.mxu0 0.0
        %1039 = vmatpush1.msra.mxu0 0.0
        %1040 = vmatprep.subr.mxu0 0.0
        %1041 = vmatpush1.msra.mxu0 0.0
        %1042 = vmatprep.subr.mxu0 0.0
        %1043 = vmatpush1.msra.mxu0 0.0
        %1044 = vmatprep.subr.mxu0 0.0
        %1045 = vmatpush1.msra.mxu0 0.0
        %1046 = vmatprep.subr.mxu0 0.0
        %1047 = vmatpush1.msra.mxu0 0.0
        %1048 = vmatprep.subr.mxu0 0.0
        %1049 = vmatpush1.msra.mxu0 0.0
        %v1050 = vand.u32 %v150, 4294901760
        %v1051 = vsub.f32 %v150, %v1050
        %v1052 = vand.u32 %v1051, 4294901760
        %1053 = vmatprep.subr.mxu0 %v1052
        %v1054 = vand.u32 %v149, 4294901760
        %v1055 = vsub.f32 %v149, %v1054
        %v1056 = vand.u32 %v1055, 4294901760
        %1057 = vmatpush1.msra.mxu0 %v1056
        %1058 = vmatprep.subr.mxu0 0.0
        %1059 = vmatpush2.msra.mxu0 0.0
        %1060 = vmatprep.subr.mxu0 0.0
        %1061 = vmatpush2.msra.mxu0 0.0
        %1062 = vmatprep.subr.mxu0 0.0
        %1063 = vmatpush2.msra.mxu0 0.0
        %1064 = vmatprep.subr.mxu0 0.0
        %1065 = vmatpush2.msra.mxu0 0.0
        %1066 = vmatprep.subr.mxu0 0.0
        %1067 = vmatpush2.msra.mxu0 0.0
        %1068 = vmatprep.subr.mxu0 0.0
        %1069 = vmatpush2.msra.mxu0 0.0
        %1070 = vmatprep.subr.mxu0 0.0
        %1071 = vmatpush2.msra.mxu0 0.0
        %1072 = vmatprep.subr.mxu0 0.0
        %1073 = vmatpush2.msra.mxu0 0.0
        %1074 = vmatprep.subr.mxu0 0.0
        %1075 = vmatpush2.msra.mxu0 0.0
        %1076 = vmatprep.subr.mxu0 0.0
        %1077 = vmatpush2.msra.mxu0 0.0
        %1078 = vmatprep.subr.mxu0 0.0
        %1079 = vmatpush2.msra.mxu0 0.0
        %1080 = vmatprep.subr.mxu0 0.0
        %1081 = vmatpush2.msra.mxu0 0.0
        %1082 = vmatprep.subr.mxu0 0.0
        %1083 = vmatpush2.msra.mxu0 0.0
        %1084 = vmatprep.subr.mxu0 0.0
        %1085 = vmatpush2.msra.mxu0 0.0
        %1086 = vmatprep.subr.mxu0 0.0
        %1087 = vmatpush2.msra.mxu0 0.0
        %1088 = vmatprep.subr.mxu0 0.0
        %1089 = vmatpush2.msra.mxu0 0.0
        %1090 = vmatprep.mubr.f32.mxu0 0.0
        %v1091 = vand.u32 %v153, 4294901760
        %1092 = vmatmul.mubr.f32.gmra.mxu0 %v1091
        %v1093 = vpop.f32.mrf.mxu0
        %v1094 = vadd.f32 %v1007, %v1093
        %v1095 = vpop.f32.mrf.mxu0
        %v1096 = vadd.f32 %v1009, %v1095
        %1097 = vmatprep.mubr.f32.mxu0 0.0
        %v1098 = vand.u32 %v156, 4294901760
        %1099 = vmatmul.mubr.f32.gmra.mxu0 %v1098
        %v1100 = vpop.f32.mrf.mxu0
        %v1101 = vadd.f32 %v1016, %v1100
        %v1102 = vpop.f32.mrf.mxu0
        %v1103 = vadd.f32 %v1018, %v1102
        %1104 = vdwg.mxu0
        %1105 = vmatprep.subr.mxu0 0.0
        %1106 = vmatpush1.msra.mxu0 0.0
        %1107 = vmatprep.subr.mxu0 0.0
        %1108 = vmatpush1.msra.mxu0 0.0
        %1109 = vmatprep.subr.mxu0 0.0
        %1110 = vmatpush1.msra.mxu0 0.0
        %1111 = vmatprep.subr.mxu0 0.0
        %1112 = vmatpush1.msra.mxu0 0.0
        %1113 = vmatprep.subr.mxu0 0.0
        %1114 = vmatpush1.msra.mxu0 0.0
        %1115 = vmatprep.subr.mxu0 0.0
        %1116 = vmatpush1.msra.mxu0 0.0
        %1117 = vmatprep.subr.mxu0 0.0
        %1118 = vmatpush1.msra.mxu0 0.0
        %1119 = vmatprep.subr.mxu0 0.0
        %1120 = vmatpush1.msra.mxu0 0.0
        %1121 = vmatprep.subr.mxu0 0.0
        %1122 = vmatpush1.msra.mxu0 0.0
        %1123 = vmatprep.subr.mxu0 0.0
        %1124 = vmatpush1.msra.mxu0 0.0
        %1125 = vmatprep.subr.mxu0 0.0
        %1126 = vmatpush1.msra.mxu0 0.0
        %1127 = vmatprep.subr.mxu0 0.0
        %1128 = vmatpush1.msra.mxu0 0.0
        %1129 = vmatprep.subr.mxu0 0.0
        %1130 = vmatpush1.msra.mxu0 0.0
        %1131 = vmatprep.subr.mxu0 0.0
        %1132 = vmatpush1.msra.mxu0 0.0
        %1133 = vmatprep.subr.mxu0 0.0
        %1134 = vmatpush1.msra.mxu0 0.0
        %v1135 = vand.u32 %v150, 4294901760
        %1136 = vmatprep.subr.mxu0 %v1135
        %v1137 = vand.u32 %v149, 4294901760
        %1138 = vmatpush1.msra.mxu0 %v1137
        %1139 = vmatprep.subr.mxu0 0.0
        %1140 = vmatpush2.msra.mxu0 0.0
        %1141 = vmatprep.subr.mxu0 0.0
        %1142 = vmatpush2.msra.mxu0 0.0
        %1143 = vmatprep.subr.mxu0 0.0
        %1144 = vmatpush2.msra.mxu0 0.0
        %1145 = vmatprep.subr.mxu0 0.0
        %1146 = vmatpush2.msra.mxu0 0.0
        %1147 = vmatprep.subr.mxu0 0.0
        %1148 = vmatpush2.msra.mxu0 0.0
        %1149 = vmatprep.subr.mxu0 0.0
        %1150 = vmatpush2.msra.mxu0 0.0
        %1151 = vmatprep.subr.mxu0 0.0
        %1152 = vmatpush2.msra.mxu0 0.0
        %1153 = vmatprep.subr.mxu0 0.0
        %1154 = vmatpush2.msra.mxu0 0.0
        %1155 = vmatprep.subr.mxu0 0.0
        %1156 = vmatpush2.msra.mxu0 0.0
        %1157 = vmatprep.subr.mxu0 0.0
        %1158 = vmatpush2.msra.mxu0 0.0
        %1159 = vmatprep.subr.mxu0 0.0
        %1160 = vmatpush2.msra.mxu0 0.0
        %1161 = vmatprep.subr.mxu0 0.0
        %1162 = vmatpush2.msra.mxu0 0.0
        %1163 = vmatprep.subr.mxu0 0.0
        %1164 = vmatpush2.msra.mxu0 0.0
        %1165 = vmatprep.subr.mxu0 0.0
        %1166 = vmatpush2.msra.mxu0 0.0
        %1167 = vmatprep.subr.mxu0 0.0
        %1168 = vmatpush2.msra.mxu0 0.0
        %1169 = vmatprep.subr.mxu0 0.0
        %1170 = vmatpush2.msra.mxu0 0.0
        %1171 = vmatprep.mubr.f32.mxu0 0.0
        %v1172 = vand.u32 %v153, 4294901760
        %1173 = vmatmul.mubr.f32.gmra.mxu0 %v1172
        %v1174 = vpop.f32.mrf.mxu0
        %v1175 = vadd.f32 %v1094, %v1174
        %v1176 = vpop.f32.mrf.mxu0
        %v1177 = vadd.f32 %v1096, %v1176
        %1178 = vmatprep.mubr.f32.mxu0 0.0
        %v1179 = vand.u32 %v156, 4294901760
        %1180 = vmatmul.mubr.f32.gmra.mxu0 %v1179
        %v1181 = vpop.f32.mrf.mxu0
        %v1182 = vadd.f32 %v1101, %v1181
        %v1183 = vpop.f32.mrf.mxu0
        %v1184 = vadd.f32 %v1103, %v1183
        %1185 = vdwg.mxu0
        %v1186 = vand.u32 2147483647, %v661
        %vm1187 = vcmp.le.f32.partialorder %v1186, 0.7853982
        %vm1188 = vcmp.lt.s32.totalorder %v661, 0
        %v1189 = vand.u32 %v661, 2139095040
        %v1190 = vshrl.u32 %v1189, 23
        %v1191 = vsub.s32 %v1190, 127
        %v1192 = vand.u32 2147483647, %v661
        %v1193 = vand.u32 %v1192, 8388607
        %v1194 = vor.u32 %v1193, 8388608
        %v1195 = vsub.s32 0, %v1194
        %v1196 = vadd.s32 %v1191, 1
        %vm1197 = vcmp.gt.s32.totalorder %v1196, 0
        %v1198 = vsel %vm1197, %v1196, 0
        %v1199 = vshrl.u32 %v1198, 5
        %v1200 = vand.u32 %v1198, 31
        %v1201 = vsub.s32 32, %v1200
        %v1202 = vshrl.u32 683565275, %v1201
        %v1203 = vshll.u32 683565275, %v1200
        %v1204 = vshrl.u32 2475754826, %v1201
        %v1205 = vor.u32 %v1203, %v1204
        %v1206 = vshll.u32 2475754826, %v1200
        %v1207 = vshrl.u32 2131351028, %v1201
        %v1208 = vor.u32 %v1206, %v1207
        %v1209 = vshll.u32 2131351028, %v1200
        %v1210 = vshrl.u32 2102212464, %v1201
        %v1211 = vor.u32 %v1209, %v1210
        %v1212 = vshll.u32 2102212464, %v1200
        %v1213 = vshrl.u32 920167782, %v1201
        %v1214 = vor.u32 %v1212, %v1213
        %v1215 = vshll.u32 920167782, %v1200
        %v1216 = vshrl.u32 1326507024, %v1201
        %v1217 = vor.u32 %v1215, %v1216
        %vm1218 = vcmp.lt.s32.totalorder %v1199, 1
        %vm1219 = vcmp.lt.s32.totalorder %v1199, 2
        %vm1220 = vcmp.lt.s32.totalorder %v1199, 3
        %vm1221 = vcmp.lt.s32.totalorder %v1199, 4
        %v1222 = vsel %vm1218, %v1202, %v1205
        %v1223 = vsel %vm1221, %v1211, 2102212464
        %v1224 = vsel %vm1220, %v1208, %v1223
        %v1225 = vsel %vm1219, %v1222, %v1224
        %v1226 = vsel %vm1218, %v1205, %v1208
        %v1227 = vsel %vm1221, %v1214, 920167782
        %v1228 = vsel %vm1220, %v1211, %v1227
        %v1229 = vsel %vm1219, %v1226, %v1228
        %v1230 = vsel %vm1218, %v1208, %v1211
        %v1231 = vsel %vm1221, %v1217, 1326507024
        %v1232 = vsel %vm1220, %v1214, %v1231
        %v1233 = vsel %vm1219, %v1230, %v1232
        %v1234 = vshll.u32 %v1194, 8
        %v1235 = vmul.u32.u64.compose %v1234, %v1233
        %v1236 = vextract.low.u32 %v1235
        %v1237 = vextract.high.u32 %v1235
        %v1238 = vmul.u32.u64.compose %v1234, %v1229
        %v1239 = vextract.low.u32 %v1238
        %v1240 = vextract.high.u32 %v1238
        %v1241 = vmul.u32 %v1234, %v1225
        %v1242 = vadd.s32 %v1237, %v1239
        %vm1243 = vc.u32 %v1237, %v1239
        %v1244 = vadd.s32 %v1240, 1
        %v1245 = vsel %vm1243, %v1244, %v1240
        %v1246 = vadd.s32 %v1241, %v1245
        %v1247 = vadd.s32 %v1246, 536870912
        %v1248 = vshrl.u32 %v1247, 30
        %v1249 = vshll.u32 %v1248, 30
        %v1250 = vsub.s32 %v1246, %v1249
        %vm1251 = vcmp.lt.s32.totalorder %v1250, 0
        %v1252 = vsub.s32 0, %v1250
        %v1253 = vsel %vm1251, %v1252, %v1250
        %v1254 = vclz %v1253
        %v1255 = vsub.s32 %v1254, 2
        %vm1256 = vcmp.gt.s32.totalorder 0, %v1255
        %v1257 = vsel %vm1256, 0, %v1255
        %v1258 = vsub.s32 32, %v1257
        %v1259 = vshll.u32 %v1250, %v1257
        %v1260 = vshrl.u32 %v1242, %v1258
        %v1261 = vor.u32 %v1259, %v1260
        %v1262 = vsub.s32 4294967266, %v1257
        %v1263 = vadd.s32 %v1262, 127
        %v1264 = vshll.u32 %v1263, 23
        %v1265 = vor.u32 4788187, %v1264
        %v1266 = vand.u32 2147483647, %v1265
        %v1268 = vcvt.s32.f32 %v1261
        %v1269 = vmul.f32 %v1268, %v1266
        %v1270 = vxor.u32 %v1269, 2147483648
        %v1271 = vsel %vm1188, %v1270, %v1269
        %v1272 = vsub.s32 4, %v1248
        %v1273 = vsel %vm1188, %v1272, %v1248
        %v1274 = vsel %vm1187, %v661, %v1271
        %v1275 = vsel %vm1187, 0, %v1273
        %v1276 = vcosq.f32.pop %v1274
        %v1277 = vsinq.f32.pop %v1274
        %vm1278 = vweird.f32 %v661
        %v1279 = vadd.s32 %v1275, 3
        %v1280 = vand.u32 %v1279, 3
        %vm1281 = vcmp.lt.s32.totalorder %v1280, 2
        %vm1282 = vcmp.eq.s32.totalorder %v1280, 0
        %v1283 = vxor.u32 %v1277, 2147483648
        %v1284 = vsel %vm1282, %v1276, %v1283
        %vm1285 = vcmp.eq.s32.totalorder %v1280, 2
        %v1286 = vxor.u32 %v1276, 2147483648
        %v1287 = vsel %vm1285, %v1286, %v1277
        %v1288 = vsel %vm1281, %v1284, %v1287
        %v1289 = vsel %vm1278, nan, %v1288
        %v1290 = vand.u32 2147483647, %v663
        %vm1291 = vcmp.le.f32.partialorder %v1290, 0.7853982
        %vm1292 = vcmp.lt.s32.totalorder %v663, 0
        %v1293 = vand.u32 %v663, 2139095040
        %v1294 = vshrl.u32 %v1293, 23
        %v1295 = vsub.s32 %v1294, 127
        %v1296 = vand.u32 2147483647, %v663
        %v1297 = vand.u32 %v1296, 8388607
        %v1298 = vor.u32 %v1297, 8388608
        %v1299 = vsub.s32 0, %v1298
        %v1300 = vadd.s32 %v1295, 1
        %vm1301 = vcmp.gt.s32.totalorder %v1300, 0
        %v1302 = vsel %vm1301, %v1300, 0
        %v1303 = vshrl.u32 %v1302, 5
        %v1304 = vand.u32 %v1302, 31
        %v1305 = vsub.s32 32, %v1304
        %v1306 = vshrl.u32 683565275, %v1305
        %v1307 = vshll.u32 683565275, %v1304
        %v1308 = vshrl.u32 2475754826, %v1305
        %v1309 = vor.u32 %v1307, %v1308
        %v1310 = vshll.u32 2475754826, %v1304
        %v1311 = vshrl.u32 2131351028, %v1305
        %v1312 = vor.u32 %v1310, %v1311
        %v1313 = vshll.u32 2131351028, %v1304
        %v1314 = vshrl.u32 2102212464, %v1305
        %v1315 = vor.u32 %v1313, %v1314
        %v1316 = vshll.u32 2102212464, %v1304
        %v1317 = vshrl.u32 920167782, %v1305
        %v1318 = vor.u32 %v1316, %v1317
        %v1319 = vshll.u32 920167782, %v1304
        %v1320 = vshrl.u32 1326507024, %v1305
        %v1321 = vor.u32 %v1319, %v1320
        %vm1322 = vcmp.lt.s32.totalorder %v1303, 1
        %vm1323 = vcmp.lt.s32.totalorder %v1303, 2
        %vm1324 = vcmp.lt.s32.totalorder %v1303, 3
        %vm1325 = vcmp.lt.s32.totalorder %v1303, 4
        %v1326 = vsel %vm1322, %v1306, %v1309
        %v1327 = vsel %vm1325, %v1315, 2102212464
        %v1328 = vsel %vm1324, %v1312, %v1327
        %v1329 = vsel %vm1323, %v1326, %v1328
        %v1330 = vsel %vm1322, %v1309, %v1312
        %v1331 = vsel %vm1325, %v1318, 920167782
        %v1332 = vsel %vm1324, %v1315, %v1331
        %v1333 = vsel %vm1323, %v1330, %v1332
        %v1334 = vsel %vm1322, %v1312, %v1315
        %v1335 = vsel %vm1325, %v1321, 1326507024
        %v1336 = vsel %vm1324, %v1318, %v1335
        %v1337 = vsel %vm1323, %v1334, %v1336
        %v1338 = vshll.u32 %v1298, 8
        %v1339 = vmul.u32.u64.compose %v1338, %v1337
        %v1340 = vextract.low.u32 %v1339
        %v1341 = vextract.high.u32 %v1339
        %v1342 = vmul.u32.u64.compose %v1338, %v1333
        %v1343 = vextract.low.u32 %v1342
        %v1344 = vextract.high.u32 %v1342
        %v1345 = vmul.u32 %v1338, %v1329
        %v1346 = vadd.s32 %v1341, %v1343
        %vm1347 = vc.u32 %v1341, %v1343
        %v1348 = vadd.s32 %v1344, 1
        %v1349 = vsel %vm1347, %v1348, %v1344
        %v1350 = vadd.s32 %v1345, %v1349
        %v1351 = vadd.s32 %v1350, 536870912
        %v1352 = vshrl.u32 %v1351, 30
        %v1353 = vshll.u32 %v1352, 30
        %v1354 = vsub.s32 %v1350, %v1353
        %vm1355 = vcmp.lt.s32.totalorder %v1354, 0
        %v1356 = vsub.s32 0, %v1354
        %v1357 = vsel %vm1355, %v1356, %v1354
        %v1358 = vclz %v1357
        %v1359 = vsub.s32 %v1358, 2
        %vm1360 = vcmp.gt.s32.totalorder 0, %v1359
        %v1361 = vsel %vm1360, 0, %v1359
        %v1362 = vsub.s32 32, %v1361
        %v1363 = vshll.u32 %v1354, %v1361
        %v1364 = vshrl.u32 %v1346, %v1362
        %v1365 = vor.u32 %v1363, %v1364
        %v1366 = vsub.s32 4294967266, %v1361
        %v1367 = vadd.s32 %v1366, 127
        %v1368 = vshll.u32 %v1367, 23
        %v1369 = vor.u32 4788187, %v1368
        %v1370 = vand.u32 2147483647, %v1369
        %v1372 = vcvt.s32.f32 %v1365
        %v1373 = vmul.f32 %v1372, %v1370
        %v1374 = vxor.u32 %v1373, 2147483648
        %v1375 = vsel %vm1292, %v1374, %v1373
        %v1376 = vsub.s32 4, %v1352
        %v1377 = vsel %vm1292, %v1376, %v1352
        %v1378 = vsel %vm1291, %v663, %v1375
        %v1379 = vsel %vm1291, 0, %v1377
        %v1380 = vcosq.f32.pop %v1378
        %v1381 = vsinq.f32.pop %v1378
        %vm1382 = vweird.f32 %v663
        %v1383 = vadd.s32 %v1379, 3
        %v1384 = vand.u32 %v1383, 3
        %vm1385 = vcmp.lt.s32.totalorder %v1384, 2
        %vm1386 = vcmp.eq.s32.totalorder %v1384, 0
        %v1387 = vxor.u32 %v1381, 2147483648
        %v1388 = vsel %vm1386, %v1380, %v1387
        %vm1389 = vcmp.eq.s32.totalorder %v1384, 2
        %v1390 = vxor.u32 %v1380, 2147483648
        %v1391 = vsel %vm1389, %v1390, %v1381
        %v1392 = vsel %vm1385, %v1388, %v1391
        %v1393 = vsel %vm1382, nan, %v1392
        %v1394 = vand.u32 2147483647, %v1175
        %vm1395 = vcmp.le.f32.partialorder %v1394, 0.7853982
        %vm1396 = vcmp.lt.s32.totalorder %v1175, 0
        %v1397 = vand.u32 %v1175, 2139095040
        %v1398 = vshrl.u32 %v1397, 23
        %v1399 = vsub.s32 %v1398, 127
        %v1400 = vand.u32 2147483647, %v1175
        %v1401 = vand.u32 %v1400, 8388607
        %v1402 = vor.u32 %v1401, 8388608
        %v1403 = vsub.s32 0, %v1402
        %v1404 = vadd.s32 %v1399, 1
        %vm1405 = vcmp.gt.s32.totalorder %v1404, 0
        %v1406 = vsel %vm1405, %v1404, 0
        %v1407 = vshrl.u32 %v1406, 5
        %v1408 = vand.u32 %v1406, 31
        %v1409 = vsub.s32 32, %v1408
        %v1410 = vshrl.u32 683565275, %v1409
        %v1411 = vshll.u32 683565275, %v1408
        %v1412 = vshrl.u32 2475754826, %v1409
        %v1413 = vor.u32 %v1411, %v1412
        %v1414 = vshll.u32 2475754826, %v1408
        %v1415 = vshrl.u32 2131351028, %v1409
        %v1416 = vor.u32 %v1414, %v1415
        %v1417 = vshll.u32 2131351028, %v1408
        %v1418 = vshrl.u32 2102212464, %v1409
        %v1419 = vor.u32 %v1417, %v1418
        %v1420 = vshll.u32 2102212464, %v1408
        %v1421 = vshrl.u32 920167782, %v1409
        %v1422 = vor.u32 %v1420, %v1421
        %v1423 = vshll.u32 920167782, %v1408
        %v1424 = vshrl.u32 1326507024, %v1409
        %v1425 = vor.u32 %v1423, %v1424
        %vm1426 = vcmp.lt.s32.totalorder %v1407, 1
        %vm1427 = vcmp.lt.s32.totalorder %v1407, 2
        %vm1428 = vcmp.lt.s32.totalorder %v1407, 3
        %vm1429 = vcmp.lt.s32.totalorder %v1407, 4
        %v1430 = vsel %vm1426, %v1410, %v1413
        %v1431 = vsel %vm1429, %v1419, 2102212464
        %v1432 = vsel %vm1428, %v1416, %v1431
        %v1433 = vsel %vm1427, %v1430, %v1432
        %v1434 = vsel %vm1426, %v1413, %v1416
        %v1435 = vsel %vm1429, %v1422, 920167782
        %v1436 = vsel %vm1428, %v1419, %v1435
        %v1437 = vsel %vm1427, %v1434, %v1436
        %v1438 = vsel %vm1426, %v1416, %v1419
        %v1439 = vsel %vm1429, %v1425, 1326507024
        %v1440 = vsel %vm1428, %v1422, %v1439
        %v1441 = vsel %vm1427, %v1438, %v1440
        %v1442 = vshll.u32 %v1402, 8
        %v1443 = vmul.u32.u64.compose %v1442, %v1441
        %v1444 = vextract.low.u32 %v1443
        %v1445 = vextract.high.u32 %v1443
        %v1446 = vmul.u32.u64.compose %v1442, %v1437
        %v1447 = vextract.low.u32 %v1446
        %v1448 = vextract.high.u32 %v1446
        %v1449 = vmul.u32 %v1442, %v1433
        %v1450 = vadd.s32 %v1445, %v1447
        %vm1451 = vc.u32 %v1445, %v1447
        %v1452 = vadd.s32 %v1448, 1
        %v1453 = vsel %vm1451, %v1452, %v1448
        %v1454 = vadd.s32 %v1449, %v1453
        %v1455 = vadd.s32 %v1454, 536870912
        %v1456 = vshrl.u32 %v1455, 30
        %v1457 = vshll.u32 %v1456, 30
        %v1458 = vsub.s32 %v1454, %v1457
        %vm1459 = vcmp.lt.s32.totalorder %v1458, 0
        %v1460 = vsub.s32 0, %v1458
        %v1461 = vsel %vm1459, %v1460, %v1458
        %v1462 = vclz %v1461
        %v1463 = vsub.s32 %v1462, 2
        %vm1464 = vcmp.gt.s32.totalorder 0, %v1463
        %v1465 = vsel %vm1464, 0, %v1463
        %v1466 = vsub.s32 32, %v1465
        %v1467 = vshll.u32 %v1458, %v1465
        %v1468 = vshrl.u32 %v1450, %v1466
        %v1469 = vor.u32 %v1467, %v1468
        %v1470 = vsub.s32 4294967266, %v1465
        %v1471 = vadd.s32 %v1470, 127
        %v1472 = vshll.u32 %v1471, 23
        %v1473 = vor.u32 4788187, %v1472
        %v1474 = vand.u32 2147483647, %v1473
        %v1476 = vcvt.s32.f32 %v1469
        %v1477 = vmul.f32 %v1476, %v1474
        %v1478 = vxor.u32 %v1477, 2147483648
        %v1479 = vsel %vm1396, %v1478, %v1477
        %v1480 = vsub.s32 4, %v1456
        %v1481 = vsel %vm1396, %v1480, %v1456
        %v1482 = vsel %vm1395, %v1175, %v1479
        %v1483 = vsel %vm1395, 0, %v1481
        %v1484 = vcosq.f32.pop %v1482
        %v1485 = vsinq.f32.pop %v1482
        %vm1486 = vweird.f32 %v1175
        %v1487 = vadd.s32 %v1483, 3
        %v1488 = vand.u32 %v1487, 3
        %vm1489 = vcmp.lt.s32.totalorder %v1488, 2
        %vm1490 = vcmp.eq.s32.totalorder %v1488, 0
        %v1491 = vxor.u32 %v1485, 2147483648
        %v1492 = vsel %vm1490, %v1484, %v1491
        %vm1493 = vcmp.eq.s32.totalorder %v1488, 2
        %v1494 = vxor.u32 %v1484, 2147483648
        %v1495 = vsel %vm1493, %v1494, %v1485
        %v1496 = vsel %vm1489, %v1492, %v1495
        %v1497 = vsel %vm1486, nan, %v1496
        %v1498 = vand.u32 2147483647, %v1177
        %vm1499 = vcmp.le.f32.partialorder %v1498, 0.7853982
        %vm1500 = vcmp.lt.s32.totalorder %v1177, 0
        %v1501 = vand.u32 %v1177, 2139095040
        %v1502 = vshrl.u32 %v1501, 23
        %v1503 = vsub.s32 %v1502, 127
        %v1504 = vand.u32 2147483647, %v1177
        %v1505 = vand.u32 %v1504, 8388607
        %v1506 = vor.u32 %v1505, 8388608
        %v1507 = vsub.s32 0, %v1506
        %v1508 = vadd.s32 %v1503, 1
        %vm1509 = vcmp.gt.s32.totalorder %v1508, 0
        %v1510 = vsel %vm1509, %v1508, 0
        %v1511 = vshrl.u32 %v1510, 5
        %v1512 = vand.u32 %v1510, 31
        %v1513 = vsub.s32 32, %v1512
        %v1514 = vshrl.u32 683565275, %v1513
        %v1515 = vshll.u32 683565275, %v1512
        %v1516 = vshrl.u32 2475754826, %v1513
        %v1517 = vor.u32 %v1515, %v1516
        %v1518 = vshll.u32 2475754826, %v1512
        %v1519 = vshrl.u32 2131351028, %v1513
        %v1520 = vor.u32 %v1518, %v1519
        %v1521 = vshll.u32 2131351028, %v1512
        %v1522 = vshrl.u32 2102212464, %v1513
        %v1523 = vor.u32 %v1521, %v1522
        %v1524 = vshll.u32 2102212464, %v1512
        %v1525 = vshrl.u32 920167782, %v1513
        %v1526 = vor.u32 %v1524, %v1525
        %v1527 = vshll.u32 920167782, %v1512
        %v1528 = vshrl.u32 1326507024, %v1513
        %v1529 = vor.u32 %v1527, %v1528
        %vm1530 = vcmp.lt.s32.totalorder %v1511, 1
        %vm1531 = vcmp.lt.s32.totalorder %v1511, 2
        %vm1532 = vcmp.lt.s32.totalorder %v1511, 3
        %vm1533 = vcmp.lt.s32.totalorder %v1511, 4
        %v1534 = vsel %vm1530, %v1514, %v1517
        %v1535 = vsel %vm1533, %v1523, 2102212464
        %v1536 = vsel %vm1532, %v1520, %v1535
        %v1537 = vsel %vm1531, %v1534, %v1536
        %v1538 = vsel %vm1530, %v1517, %v1520
        %v1539 = vsel %vm1533, %v1526, 920167782
        %v1540 = vsel %vm1532, %v1523, %v1539
        %v1541 = vsel %vm1531, %v1538, %v1540
        %v1542 = vsel %vm1530, %v1520, %v1523
        %v1543 = vsel %vm1533, %v1529, 1326507024
        %v1544 = vsel %vm1532, %v1526, %v1543
        %v1545 = vsel %vm1531, %v1542, %v1544
        %v1546 = vshll.u32 %v1506, 8
        %v1547 = vmul.u32.u64.compose %v1546, %v1545
        %v1548 = vextract.low.u32 %v1547
        %v1549 = vextract.high.u32 %v1547
        %v1550 = vmul.u32.u64.compose %v1546, %v1541
        %v1551 = vextract.low.u32 %v1550
        %v1552 = vextract.high.u32 %v1550
        %v1553 = vmul.u32 %v1546, %v1537
        %v1554 = vadd.s32 %v1549, %v1551
        %vm1555 = vc.u32 %v1549, %v1551
        %v1556 = vadd.s32 %v1552, 1
        %v1557 = vsel %vm1555, %v1556, %v1552
        %v1558 = vadd.s32 %v1553, %v1557
        %v1559 = vadd.s32 %v1558, 536870912
        %v1560 = vshrl.u32 %v1559, 30
        %v1561 = vshll.u32 %v1560, 30
        %v1562 = vsub.s32 %v1558, %v1561
        %vm1563 = vcmp.lt.s32.totalorder %v1562, 0
        %v1564 = vsub.s32 0, %v1562
        %v1565 = vsel %vm1563, %v1564, %v1562
        %v1566 = vclz %v1565
        %v1567 = vsub.s32 %v1566, 2
        %vm1568 = vcmp.gt.s32.totalorder 0, %v1567
        %v1569 = vsel %vm1568, 0, %v1567
        %v1570 = vsub.s32 32, %v1569
        %v1571 = vshll.u32 %v1562, %v1569
        %v1572 = vshrl.u32 %v1554, %v1570
        %v1573 = vor.u32 %v1571, %v1572
        %v1574 = vsub.s32 4294967266, %v1569
        %v1575 = vadd.s32 %v1574, 127
        %v1576 = vshll.u32 %v1575, 23
        %v1577 = vor.u32 4788187, %v1576
        %v1578 = vand.u32 2147483647, %v1577
        %v1580 = vcvt.s32.f32 %v1573
        %v1581 = vmul.f32 %v1580, %v1578
        %v1582 = vxor.u32 %v1581, 2147483648
        %v1583 = vsel %vm1500, %v1582, %v1581
        %v1584 = vsub.s32 4, %v1560
        %v1585 = vsel %vm1500, %v1584, %v1560
        %v1586 = vsel %vm1499, %v1177, %v1583
        %v1587 = vsel %vm1499, 0, %v1585
        %v1588 = vcosq.f32.pop %v1586
        %v1589 = vsinq.f32.pop %v1586
        %vm1590 = vweird.f32 %v1177
        %v1591 = vadd.s32 %v1587, 3
        %v1592 = vand.u32 %v1591, 3
        %vm1593 = vcmp.lt.s32.totalorder %v1592, 2
        %vm1594 = vcmp.eq.s32.totalorder %v1592, 0
        %v1595 = vxor.u32 %v1589, 2147483648
        %v1596 = vsel %vm1594, %v1588, %v1595
        %vm1597 = vcmp.eq.s32.totalorder %v1592, 2
        %v1598 = vxor.u32 %v1588, 2147483648
        %v1599 = vsel %vm1597, %v1598, %v1589
        %v1600 = vsel %vm1593, %v1596, %v1599
        %v1601 = vsel %vm1590, nan, %v1600
        %v1602 = vand.u32 2147483647, %v668
        %vm1603 = vcmp.le.f32.partialorder %v1602, 0.7853982
        %vm1604 = vcmp.lt.s32.totalorder %v668, 0
        %v1605 = vand.u32 %v668, 2139095040
        %v1606 = vshrl.u32 %v1605, 23
        %v1607 = vsub.s32 %v1606, 127
        %v1608 = vand.u32 2147483647, %v668
        %v1609 = vand.u32 %v1608, 8388607
        %v1610 = vor.u32 %v1609, 8388608
        %v1611 = vsub.s32 0, %v1610
        %v1612 = vadd.s32 %v1607, 1
        %vm1613 = vcmp.gt.s32.totalorder %v1612, 0
        %v1614 = vsel %vm1613, %v1612, 0
        %v1615 = vshrl.u32 %v1614, 5
        %v1616 = vand.u32 %v1614, 31
        %v1617 = vsub.s32 32, %v1616
        %v1618 = vshrl.u32 683565275, %v1617
        %v1619 = vshll.u32 683565275, %v1616
        %v1620 = vshrl.u32 2475754826, %v1617
        %v1621 = vor.u32 %v1619, %v1620
        %v1622 = vshll.u32 2475754826, %v1616
        %v1623 = vshrl.u32 2131351028, %v1617
        %v1624 = vor.u32 %v1622, %v1623
        %v1625 = vshll.u32 2131351028, %v1616
        %v1626 = vshrl.u32 2102212464, %v1617
        %v1627 = vor.u32 %v1625, %v1626
        %v1628 = vshll.u32 2102212464, %v1616
        %v1629 = vshrl.u32 920167782, %v1617
        %v1630 = vor.u32 %v1628, %v1629
        %v1631 = vshll.u32 920167782, %v1616
        %v1632 = vshrl.u32 1326507024, %v1617
        %v1633 = vor.u32 %v1631, %v1632
        %vm1634 = vcmp.lt.s32.totalorder %v1615, 1
        %vm1635 = vcmp.lt.s32.totalorder %v1615, 2
        %vm1636 = vcmp.lt.s32.totalorder %v1615, 3
        %vm1637 = vcmp.lt.s32.totalorder %v1615, 4
        %v1638 = vsel %vm1634, %v1618, %v1621
        %v1639 = vsel %vm1637, %v1627, 2102212464
        %v1640 = vsel %vm1636, %v1624, %v1639
        %v1641 = vsel %vm1635, %v1638, %v1640
        %v1642 = vsel %vm1634, %v1621, %v1624
        %v1643 = vsel %vm1637, %v1630, 920167782
        %v1644 = vsel %vm1636, %v1627, %v1643
        %v1645 = vsel %vm1635, %v1642, %v1644
        %v1646 = vsel %vm1634, %v1624, %v1627
        %v1647 = vsel %vm1637, %v1633, 1326507024
        %v1648 = vsel %vm1636, %v1630, %v1647
        %v1649 = vsel %vm1635, %v1646, %v1648
        %v1650 = vshll.u32 %v1610, 8
        %v1651 = vmul.u32.u64.compose %v1650, %v1649
        %v1652 = vextract.low.u32 %v1651
        %v1653 = vextract.high.u32 %v1651
        %v1654 = vmul.u32.u64.compose %v1650, %v1645
        %v1655 = vextract.low.u32 %v1654
        %v1656 = vextract.high.u32 %v1654
        %v1657 = vmul.u32 %v1650, %v1641
        %v1658 = vadd.s32 %v1653, %v1655
        %vm1659 = vc.u32 %v1653, %v1655
        %v1660 = vadd.s32 %v1656, 1
        %v1661 = vsel %vm1659, %v1660, %v1656
        %v1662 = vadd.s32 %v1657, %v1661
        %v1663 = vadd.s32 %v1662, 536870912
        %v1664 = vshrl.u32 %v1663, 30
        %v1665 = vshll.u32 %v1664, 30
        %v1666 = vsub.s32 %v1662, %v1665
        %vm1667 = vcmp.lt.s32.totalorder %v1666, 0
        %v1668 = vsub.s32 0, %v1666
        %v1669 = vsel %vm1667, %v1668, %v1666
        %v1670 = vclz %v1669
        %v1671 = vsub.s32 %v1670, 2
        %vm1672 = vcmp.gt.s32.totalorder 0, %v1671
        %v1673 = vsel %vm1672, 0, %v1671
        %v1674 = vsub.s32 32, %v1673
        %v1675 = vshll.u32 %v1666, %v1673
        %v1676 = vshrl.u32 %v1658, %v1674
        %v1677 = vor.u32 %v1675, %v1676
        %v1678 = vsub.s32 4294967266, %v1673
        %v1679 = vadd.s32 %v1678, 127
        %v1680 = vshll.u32 %v1679, 23
        %v1681 = vor.u32 4788187, %v1680
        %v1682 = vand.u32 2147483647, %v1681
        %v1684 = vcvt.s32.f32 %v1677
        %v1685 = vmul.f32 %v1684, %v1682
        %v1686 = vxor.u32 %v1685, 2147483648
        %v1687 = vsel %vm1604, %v1686, %v1685
        %v1688 = vsub.s32 4, %v1664
        %v1689 = vsel %vm1604, %v1688, %v1664
        %v1690 = vsel %vm1603, %v668, %v1687
        %v1691 = vsel %vm1603, 0, %v1689
        %v1692 = vcosq.f32.pop %v1690
        %v1693 = vsinq.f32.pop %v1690
        %vm1694 = vweird.f32 %v668
        %v1695 = vadd.s32 %v1691, 3
        %v1696 = vand.u32 %v1695, 3
        %vm1697 = vcmp.lt.s32.totalorder %v1696, 2
        %vm1698 = vcmp.eq.s32.totalorder %v1696, 0
        %v1699 = vxor.u32 %v1693, 2147483648
        %v1700 = vsel %vm1698, %v1692, %v1699
        %vm1701 = vcmp.eq.s32.totalorder %v1696, 2
        %v1702 = vxor.u32 %v1692, 2147483648
        %v1703 = vsel %vm1701, %v1702, %v1693
        %v1704 = vsel %vm1697, %v1700, %v1703
        %v1705 = vsel %vm1694, nan, %v1704
        %v1706 = vand.u32 2147483647, %v670
        %vm1707 = vcmp.le.f32.partialorder %v1706, 0.7853982
        %vm1708 = vcmp.lt.s32.totalorder %v670, 0
        %v1709 = vand.u32 %v670, 2139095040
        %v1710 = vshrl.u32 %v1709, 23
        %v1711 = vsub.s32 %v1710, 127
        %v1712 = vand.u32 2147483647, %v670
        %v1713 = vand.u32 %v1712, 8388607
        %v1714 = vor.u32 %v1713, 8388608
        %v1715 = vsub.s32 0, %v1714
        %v1716 = vadd.s32 %v1711, 1
        %vm1717 = vcmp.gt.s32.totalorder %v1716, 0
        %v1718 = vsel %vm1717, %v1716, 0
        %v1719 = vshrl.u32 %v1718, 5
        %v1720 = vand.u32 %v1718, 31
        %v1721 = vsub.s32 32, %v1720
        %v1722 = vshrl.u32 683565275, %v1721
        %v1723 = vshll.u32 683565275, %v1720
        %v1724 = vshrl.u32 2475754826, %v1721
        %v1725 = vor.u32 %v1723, %v1724
        %v1726 = vshll.u32 2475754826, %v1720
        %v1727 = vshrl.u32 2131351028, %v1721
        %v1728 = vor.u32 %v1726, %v1727
        %v1729 = vshll.u32 2131351028, %v1720
        %v1730 = vshrl.u32 2102212464, %v1721
        %v1731 = vor.u32 %v1729, %v1730
        %v1732 = vshll.u32 2102212464, %v1720
        %v1733 = vshrl.u32 920167782, %v1721
        %v1734 = vor.u32 %v1732, %v1733
        %v1735 = vshll.u32 920167782, %v1720
        %v1736 = vshrl.u32 1326507024, %v1721
        %v1737 = vor.u32 %v1735, %v1736
        %vm1738 = vcmp.lt.s32.totalorder %v1719, 1
        %vm1739 = vcmp.lt.s32.totalorder %v1719, 2
        %vm1740 = vcmp.lt.s32.totalorder %v1719, 3
        %vm1741 = vcmp.lt.s32.totalorder %v1719, 4
        %v1742 = vsel %vm1738, %v1722, %v1725
        %v1743 = vsel %vm1741, %v1731, 2102212464
        %v1744 = vsel %vm1740, %v1728, %v1743
        %v1745 = vsel %vm1739, %v1742, %v1744
        %v1746 = vsel %vm1738, %v1725, %v1728
        %v1747 = vsel %vm1741, %v1734, 920167782
        %v1748 = vsel %vm1740, %v1731, %v1747
        %v1749 = vsel %vm1739, %v1746, %v1748
        %v1750 = vsel %vm1738, %v1728, %v1731
        %v1751 = vsel %vm1741, %v1737, 1326507024
        %v1752 = vsel %vm1740, %v1734, %v1751
        %v1753 = vsel %vm1739, %v1750, %v1752
        %v1754 = vshll.u32 %v1714, 8
        %v1755 = vmul.u32.u64.compose %v1754, %v1753
        %v1756 = vextract.low.u32 %v1755
        %v1757 = vextract.high.u32 %v1755
        %v1758 = vmul.u32.u64.compose %v1754, %v1749
        %v1759 = vextract.low.u32 %v1758
        %v1760 = vextract.high.u32 %v1758
        %v1761 = vmul.u32 %v1754, %v1745
        %v1762 = vadd.s32 %v1757, %v1759
        %vm1763 = vc.u32 %v1757, %v1759
        %v1764 = vadd.s32 %v1760, 1
        %v1765 = vsel %vm1763, %v1764, %v1760
        %v1766 = vadd.s32 %v1761, %v1765
        %v1767 = vadd.s32 %v1766, 536870912
        %v1768 = vshrl.u32 %v1767, 30
        %v1769 = vshll.u32 %v1768, 30
        %v1770 = vsub.s32 %v1766, %v1769
        %vm1771 = vcmp.lt.s32.totalorder %v1770, 0
        %v1772 = vsub.s32 0, %v1770
        %v1773 = vsel %vm1771, %v1772, %v1770
        %v1774 = vclz %v1773
        %v1775 = vsub.s32 %v1774, 2
        %vm1776 = vcmp.gt.s32.totalorder 0, %v1775
        %v1777 = vsel %vm1776, 0, %v1775
        %v1778 = vsub.s32 32, %v1777
        %v1779 = vshll.u32 %v1770, %v1777
        %v1780 = vshrl.u32 %v1762, %v1778
        %v1781 = vor.u32 %v1779, %v1780
        %v1782 = vsub.s32 4294967266, %v1777
        %v1783 = vadd.s32 %v1782, 127
        %v1784 = vshll.u32 %v1783, 23
        %v1785 = vor.u32 4788187, %v1784
        %v1786 = vand.u32 2147483647, %v1785
        %v1788 = vcvt.s32.f32 %v1781
        %v1789 = vmul.f32 %v1788, %v1786
        %v1790 = vxor.u32 %v1789, 2147483648
        %v1791 = vsel %vm1708, %v1790, %v1789
        %v1792 = vsub.s32 4, %v1768
        %v1793 = vsel %vm1708, %v1792, %v1768
        %v1794 = vsel %vm1707, %v670, %v1791
        %v1795 = vsel %vm1707, 0, %v1793
        %v1796 = vcosq.f32.pop %v1794
        %v1797 = vsinq.f32.pop %v1794
        %vm1798 = vweird.f32 %v670
        %v1799 = vadd.s32 %v1795, 3
        %v1800 = vand.u32 %v1799, 3
        %vm1801 = vcmp.lt.s32.totalorder %v1800, 2
        %vm1802 = vcmp.eq.s32.totalorder %v1800, 0
        %v1803 = vxor.u32 %v1797, 2147483648
        %v1804 = vsel %vm1802, %v1796, %v1803
        %vm1805 = vcmp.eq.s32.totalorder %v1800, 2
        %v1806 = vxor.u32 %v1796, 2147483648
        %v1807 = vsel %vm1805, %v1806, %v1797
        %v1808 = vsel %vm1801, %v1804, %v1807
        %v1809 = vsel %vm1798, nan, %v1808
        %v1810 = vand.u32 2147483647, %v1182
        %vm1811 = vcmp.le.f32.partialorder %v1810, 0.7853982
        %vm1812 = vcmp.lt.s32.totalorder %v1182, 0
        %v1813 = vand.u32 %v1182, 2139095040
        %v1814 = vshrl.u32 %v1813, 23
        %v1815 = vsub.s32 %v1814, 127
        %v1816 = vand.u32 2147483647, %v1182
        %v1817 = vand.u32 %v1816, 8388607
        %v1818 = vor.u32 %v1817, 8388608
        %v1819 = vsub.s32 0, %v1818
        %v1820 = vadd.s32 %v1815, 1
        %vm1821 = vcmp.gt.s32.totalorder %v1820, 0
        %v1822 = vsel %vm1821, %v1820, 0
        %v1823 = vshrl.u32 %v1822, 5
        %v1824 = vand.u32 %v1822, 31
        %v1825 = vsub.s32 32, %v1824
        %v1826 = vshrl.u32 683565275, %v1825
        %v1827 = vshll.u32 683565275, %v1824
        %v1828 = vshrl.u32 2475754826, %v1825
        %v1829 = vor.u32 %v1827, %v1828
        %v1830 = vshll.u32 2475754826, %v1824
        %v1831 = vshrl.u32 2131351028, %v1825
        %v1832 = vor.u32 %v1830, %v1831
        %v1833 = vshll.u32 2131351028, %v1824
        %v1834 = vshrl.u32 2102212464, %v1825
        %v1835 = vor.u32 %v1833, %v1834
        %v1836 = vshll.u32 2102212464, %v1824
        %v1837 = vshrl.u32 920167782, %v1825
        %v1838 = vor.u32 %v1836, %v1837
        %v1839 = vshll.u32 920167782, %v1824
        %v1840 = vshrl.u32 1326507024, %v1825
        %v1841 = vor.u32 %v1839, %v1840
        %vm1842 = vcmp.lt.s32.totalorder %v1823, 1
        %vm1843 = vcmp.lt.s32.totalorder %v1823, 2
        %vm1844 = vcmp.lt.s32.totalorder %v1823, 3
        %vm1845 = vcmp.lt.s32.totalorder %v1823, 4
        %v1846 = vsel %vm1842, %v1826, %v1829
        %v1847 = vsel %vm1845, %v1835, 2102212464
        %v1848 = vsel %vm1844, %v1832, %v1847
        %v1849 = vsel %vm1843, %v1846, %v1848
        %v1850 = vsel %vm1842, %v1829, %v1832
        %v1851 = vsel %vm1845, %v1838, 920167782
        %v1852 = vsel %vm1844, %v1835, %v1851
        %v1853 = vsel %vm1843, %v1850, %v1852
        %v1854 = vsel %vm1842, %v1832, %v1835
        %v1855 = vsel %vm1845, %v1841, 1326507024
        %v1856 = vsel %vm1844, %v1838, %v1855
        %v1857 = vsel %vm1843, %v1854, %v1856
        %v1858 = vshll.u32 %v1818, 8
        %v1859 = vmul.u32.u64.compose %v1858, %v1857
        %v1860 = vextract.low.u32 %v1859
        %v1861 = vextract.high.u32 %v1859
        %v1862 = vmul.u32.u64.compose %v1858, %v1853
        %v1863 = vextract.low.u32 %v1862
        %v1864 = vextract.high.u32 %v1862
        %v1865 = vmul.u32 %v1858, %v1849
        %v1866 = vadd.s32 %v1861, %v1863
        %vm1867 = vc.u32 %v1861, %v1863
        %v1868 = vadd.s32 %v1864, 1
        %v1869 = vsel %vm1867, %v1868, %v1864
        %v1870 = vadd.s32 %v1865, %v1869
        %v1871 = vadd.s32 %v1870, 536870912
        %v1872 = vshrl.u32 %v1871, 30
        %v1873 = vshll.u32 %v1872, 30
        %v1874 = vsub.s32 %v1870, %v1873
        %vm1875 = vcmp.lt.s32.totalorder %v1874, 0
        %v1876 = vsub.s32 0, %v1874
        %v1877 = vsel %vm1875, %v1876, %v1874
        %v1878 = vclz %v1877
        %v1879 = vsub.s32 %v1878, 2
        %vm1880 = vcmp.gt.s32.totalorder 0, %v1879
        %v1881 = vsel %vm1880, 0, %v1879
        %v1882 = vsub.s32 32, %v1881
        %v1883 = vshll.u32 %v1874, %v1881
        %v1884 = vshrl.u32 %v1866, %v1882
        %v1885 = vor.u32 %v1883, %v1884
        %v1886 = vsub.s32 4294967266, %v1881
        %v1887 = vadd.s32 %v1886, 127
        %v1888 = vshll.u32 %v1887, 23
        %v1889 = vor.u32 4788187, %v1888
        %v1890 = vand.u32 2147483647, %v1889
        %v1892 = vcvt.s32.f32 %v1885
        %v1893 = vmul.f32 %v1892, %v1890
        %v1894 = vxor.u32 %v1893, 2147483648
        %v1895 = vsel %vm1812, %v1894, %v1893
        %v1896 = vsub.s32 4, %v1872
        %v1897 = vsel %vm1812, %v1896, %v1872
        %v1898 = vsel %vm1811, %v1182, %v1895
        %v1899 = vsel %vm1811, 0, %v1897
        %v1900 = vcosq.f32.pop %v1898
        %v1901 = vsinq.f32.pop %v1898
        %vm1902 = vweird.f32 %v1182
        %v1903 = vadd.s32 %v1899, 3
        %v1904 = vand.u32 %v1903, 3
        %vm1905 = vcmp.lt.s32.totalorder %v1904, 2
        %vm1906 = vcmp.eq.s32.totalorder %v1904, 0
        %v1907 = vxor.u32 %v1901, 2147483648
        %v1908 = vsel %vm1906, %v1900, %v1907
        %vm1909 = vcmp.eq.s32.totalorder %v1904, 2
        %v1910 = vxor.u32 %v1900, 2147483648
        %v1911 = vsel %vm1909, %v1910, %v1901
        %v1912 = vsel %vm1905, %v1908, %v1911
        %v1913 = vsel %vm1902, nan, %v1912
        %v1914 = vand.u32 2147483647, %v1184
        %vm1915 = vcmp.le.f32.partialorder %v1914, 0.7853982
        %vm1916 = vcmp.lt.s32.totalorder %v1184, 0
        %v1917 = vand.u32 %v1184, 2139095040
        %v1918 = vshrl.u32 %v1917, 23
        %v1919 = vsub.s32 %v1918, 127
        %v1920 = vand.u32 2147483647, %v1184
        %v1921 = vand.u32 %v1920, 8388607
        %v1922 = vor.u32 %v1921, 8388608
        %v1923 = vsub.s32 0, %v1922
        %v1924 = vadd.s32 %v1919, 1
        %vm1925 = vcmp.gt.s32.totalorder %v1924, 0
        %v1926 = vsel %vm1925, %v1924, 0
        %v1927 = vshrl.u32 %v1926, 5
        %v1928 = vand.u32 %v1926, 31
        %v1929 = vsub.s32 32, %v1928
        %v1930 = vshrl.u32 683565275, %v1929
        %v1931 = vshll.u32 683565275, %v1928
        %v1932 = vshrl.u32 2475754826, %v1929
        %v1933 = vor.u32 %v1931, %v1932
        %v1934 = vshll.u32 2475754826, %v1928
        %v1935 = vshrl.u32 2131351028, %v1929
        %v1936 = vor.u32 %v1934, %v1935
        %v1937 = vshll.u32 2131351028, %v1928
        %v1938 = vshrl.u32 2102212464, %v1929
        %v1939 = vor.u32 %v1937, %v1938
        %v1940 = vshll.u32 2102212464, %v1928
        %v1941 = vshrl.u32 920167782, %v1929
        %v1942 = vor.u32 %v1940, %v1941
        %v1943 = vshll.u32 920167782, %v1928
        %v1944 = vshrl.u32 1326507024, %v1929
        %v1945 = vor.u32 %v1943, %v1944
        %vm1946 = vcmp.lt.s32.totalorder %v1927, 1
        %vm1947 = vcmp.lt.s32.totalorder %v1927, 2
        %vm1948 = vcmp.lt.s32.totalorder %v1927, 3
        %vm1949 = vcmp.lt.s32.totalorder %v1927, 4
        %v1950 = vsel %vm1946, %v1930, %v1933
        %v1951 = vsel %vm1949, %v1939, 2102212464
        %v1952 = vsel %vm1948, %v1936, %v1951
        %v1953 = vsel %vm1947, %v1950, %v1952
        %v1954 = vsel %vm1946, %v1933, %v1936
        %v1955 = vsel %vm1949, %v1942, 920167782
        %v1956 = vsel %vm1948, %v1939, %v1955
        %v1957 = vsel %vm1947, %v1954, %v1956
        %v1958 = vsel %vm1946, %v1936, %v1939
        %v1959 = vsel %vm1949, %v1945, 1326507024
        %v1960 = vsel %vm1948, %v1942, %v1959
        %v1961 = vsel %vm1947, %v1958, %v1960
        %v1962 = vshll.u32 %v1922, 8
        %v1963 = vmul.u32.u64.compose %v1962, %v1961
        %v1964 = vextract.low.u32 %v1963
        %v1965 = vextract.high.u32 %v1963
        %v1966 = vmul.u32.u64.compose %v1962, %v1957
        %v1967 = vextract.low.u32 %v1966
        %v1968 = vextract.high.u32 %v1966
        %v1969 = vmul.u32 %v1962, %v1953
        %v1970 = vadd.s32 %v1965, %v1967
        %vm1971 = vc.u32 %v1965, %v1967
        %v1972 = vadd.s32 %v1968, 1
        %v1973 = vsel %vm1971, %v1972, %v1968
        %v1974 = vadd.s32 %v1969, %v1973
        %v1975 = vadd.s32 %v1974, 536870912
        %v1976 = vshrl.u32 %v1975, 30
        %v1977 = vshll.u32 %v1976, 30
        %v1978 = vsub.s32 %v1974, %v1977
        %vm1979 = vcmp.lt.s32.totalorder %v1978, 0
        %v1980 = vsub.s32 0, %v1978
        %v1981 = vsel %vm1979, %v1980, %v1978
        %v1982 = vclz %v1981
        %v1983 = vsub.s32 %v1982, 2
        %vm1984 = vcmp.gt.s32.totalorder 0, %v1983
        %v1985 = vsel %vm1984, 0, %v1983
        %v1986 = vsub.s32 32, %v1985
        %v1987 = vshll.u32 %v1978, %v1985
        %v1988 = vshrl.u32 %v1970, %v1986
        %v1989 = vor.u32 %v1987, %v1988
        %v1990 = vsub.s32 4294967266, %v1985
        %v1991 = vadd.s32 %v1990, 127
        %v1992 = vshll.u32 %v1991, 23
        %v1993 = vor.u32 4788187, %v1992
        %v1994 = vand.u32 2147483647, %v1993
        %v1996 = vcvt.s32.f32 %v1989
        %v1997 = vmul.f32 %v1996, %v1994
        %v1998 = vxor.u32 %v1997, 2147483648
        %v1999 = vsel %vm1916, %v1998, %v1997
        %v2000 = vsub.s32 4, %v1976
        %v2001 = vsel %vm1916, %v2000, %v1976
        %v2002 = vsel %vm1915, %v1184, %v1999
        %v2003 = vsel %vm1915, 0, %v2001
        %v2004 = vcosq.f32.pop %v2002
        %v2005 = vsinq.f32.pop %v2002
        %vm2006 = vweird.f32 %v1184
        %v2007 = vadd.s32 %v2003, 3
        %v2008 = vand.u32 %v2007, 3
        %vm2009 = vcmp.lt.s32.totalorder %v2008, 2
        %vm2010 = vcmp.eq.s32.totalorder %v2008, 0
        %v2011 = vxor.u32 %v2005, 2147483648
        %v2012 = vsel %vm2010, %v2004, %v2011
        %vm2013 = vcmp.eq.s32.totalorder %v2008, 2
        %v2014 = vxor.u32 %v2004, 2147483648
        %v2015 = vsel %vm2013, %v2014, %v2005
        %v2016 = vsel %vm2009, %v2012, %v2015
        %v2017 = vsel %vm2006, nan, %v2016
        %2018 = vst [vmem:[%s137] sm:$0xff] %v1289
        %2019 = vst [vmem:[%s137 + $0x8] sm:$0xff] %v1393
        %2020 = vst [vmem:[%s137 + $0x10] sm:$0xff] %v1497
        %2021 = vst [vmem:[%s137 + $0x18] sm:$0xff] %v1601
        %2022 = vst [vmem:[%s137 + $0x20] sm:$0xff] %v1705
        %2023 = vst [vmem:[%s137 + $0x28] sm:$0xff] %v1809
        %2024 = vst [vmem:[%s137 + $0x30] sm:$0xff] %v1913
        %2025 = vst [vmem:[%s137 + $0x38] sm:$0xff] %v2017
        %s2026 = sand.u32 %s71, 1
        %s2027 = scalar_lea.sflag [#allocation3], %s2026
        %s2028 = sand.u32 %s71, 1
        %s2029 = smul.addr %s2028, 64
        %s2030 = scalar_lea.vmem [#allocation2], %s2029
        // Predicated region
        $region29: #{tpu_custom_call.1} parent=27 // pred_check
          %p2031 = pneg %p81
        $region30: #{tpu_custom_call.1} parent=27 // pred_check_branch
          %2033 = sbr.rel (%p2031) target = $region32
        $region31: #{tpu_custom_call.1} parent=27 // pred_region
          %s2034 = smul.u32 2, %s16
          %s2036 = ssub.s32 1024, 1024
          %2037 = vsyncadd %s2027, %s2036
          %s2038 = smul.addr %s2034, 4
          %s2039 = smul.addr %s2038, 128
          %s2040 = scalar_lea.hbm %s2, %s2039
          %s2041 = sshll.u32 %s2030, 4
          %s2042 = int_to_ptr.vmem [resolvable:$true] %s2041
          %2047 = dma.vmem_to_hbm [thread:$0]  %s2042, 1024, %s2040, %s2027, 512, 512, 32
        $region32: #{tpu_custom_call.1} parent=27 // pred_fallthru
          _
      $region28: #{tpu_custom_call.1} parent=5 // pred_fallthru
        _
      %p2048 = scmp.le.s32.totalorder 2, %s11
      // Predicated region
      $region33: #{tpu_custom_call.1} parent=5 // pred_check
        %p2049 = pneg %p2048
      $region34: #{tpu_custom_call.1} parent=5 // pred_check_branch
        %2051 = sbr.rel (%p2049) target = $region36
      $region35: #{tpu_custom_call.1} parent=5 // pred_region
        %s2052 = ssub.s32 %s11, 2
        // Predicated region
        $region37: #{tpu_custom_call.1} parent=35 // pred_check
          %p2053 = pneg %p87
        $region38: #{tpu_custom_call.1} parent=35 // pred_check_branch
          %2055 = sbr.rel (%p2053) target = $region40
        $region39: #{tpu_custom_call.1} parent=35 // pred_region
          %s2056 = sand.u32 %s72, 1
          %s2057 = scalar_lea.sflag [#allocation3], %s2056
          %s2058 = sand.u32 %s72, 1
          %s2059 = smul.addr %s2058, 64
          %s2060 = scalar_lea.vmem [#allocation2], %s2059
          %2061 = dma.done %s2057, 1024
        $region40: #{tpu_custom_call.1} parent=35 // pred_fallthru
          _
      $region36: #{tpu_custom_call.1} parent=5 // pred_fallthru
        _
    $region6: #{tpu_custom_call.1} parent=1 // loop_footer
      %s15 = sadd.s32 1, %s11
    $region7: #{tpu_custom_call.1} parent=1 // loop_footer_branch
      %10 = sbr.rel target = $region3
    $region8: #{tpu_custom_call.1} parent=1 // loop_exit
      _
    %2062 = vsyncpa [#allocation3], 1
    %s2063 = scalar_lea.sflag [#allocation3], 1
    %2064 = vsyncpa %s2063, 1

</llo_original>
